<compile_context>
chip_gen: v7x
topology: tpu7x:2x2x1
jax: 0.10.0
libtpu: 0.0.40
codegen_flags: <defaults>
</compile_context>

<pallas_src>
import functools

import jax
import jax.numpy as jnp
from jax.experimental import pallas as pl
from jax.experimental.pallas import tpu as pltpu


def _round_up(x, m):
    return ((x + m - 1) // m) * m


def _reward_decoder_kernel(
    x_ref,                        # (Kp, bt)  packed [ns | tanh(a) | ps | lat]^T
    wenc_ref, benc_ref, flo_ref,  # merged encoder: (P, Kp), (P, 1), (P, 1)
    w1_ref, b1_ref,               # fc_layers[0]: (H1, P), (H1, 1)
    w2_ref, b2_ref,               # fc_layers[1]: (H2, H1), (H2, 1)
    wout_ref, bout_ref,           # fc_out: (8, H2) (row 0 = w_out), scalar bias in SMEM
    out_ref,                      # (1, bt)
):
    f32 = jnp.float32
    cdt = wenc_ref.dtype                     # matmul operand dtype (f32 or bf16)

    x = x_ref[...]                            # already in matmul dtype

    # Encoder stage as ONE dot producing the placed slab
    #   [relu(ns@Wse+bse) | relu(a@Wae+bae) | relu(ps@Wse+bse) | latent | 0-pad]
    # The latent band uses an identity weight block, zero bias and a -1e30
    # floor, so the jnp.maximum passes it through unchanged (relu elsewhere).
    raw = jnp.dot(wenc_ref[...], x, preferred_element_type=f32) + benc_ref[...]
    slab = jnp.maximum(raw, flo_ref[...])

    # fc_layers[0] (latent rows folded into the slab weight): relu
    h1 = jnp.dot(w1_ref[...], slab.astype(cdt), preferred_element_type=f32)
    h1 = jnp.maximum(h1 + b1_ref[...], 0.0)

    # fc_layers[1]: relu
    h2 = jnp.dot(w2_ref[...], h1.astype(cdt), preferred_element_type=f32)
    h2 = jnp.maximum(h2 + b2_ref[...], 0.0)

    # fc_out (output dim 1) on the MXU (it has slack after the merges); rows
    # 1..7 of wout are zero padding (MXU pads to 8 rows anyway), which also
    # avoids an M=1 matmul corner case for free.  Lane-dense (1, bt) store.
    o8 = jnp.dot(wout_ref[...], h2.astype(cdt), preferred_element_type=f32)
    out_ref[...] = o8[0:1, :] + bout_ref[0, 0]


def reward_decoder_forward(params, latent_state, next_state, prev_state, actions,
                           *, block_batch=2048, matmul_dtype=jnp.bfloat16,
                           vmem_limit_bytes=None):
    """RewardDecoder forward.  Batch lives on the lane axis; weights stay VMEM-resident."""
    (w_se, b_se, w_ae, b_ae, w1, b1, w2, b2, w_out, b_out) = params
    f32 = jnp.float32
    mdt = matmul_dtype

    B, L = latent_state.shape
    S = next_state.shape[-1]
    A = actions.shape[-1]
    SE = w_se.shape[1]
    AE = w_ae.shape[1]
    H1 = w1.shape[1]
    H2 = w2.shape[1]

    # ---- packed-input / slab geometry --------------------------------------
    Kin = S + A + S + L                     # packed rows: [ns | a | ps | lat]
    Kp = _round_up(Kin, 128)                # padded packed width (sublane dim)
    r_ns, r_a, r_ps, r_lat = 0, S, S + A, S + A + S

    Pw = 2 * SE + AE + L                    # slab bands: [hns | ha | hps | lat]
    P = _round_up(Pw, 128)                  # lane-padded slab width
    c_ns, c_a, c_ps, c_lat = 0, SE, SE + AE, 2 * SE + AE

    # ---- merged encoder weight (zero-placed bands + latent identity) -------
    w_enc = jnp.zeros((Kp, P), f32)
    w_enc = w_enc.at[r_ns:r_ns + S, c_ns:c_ns + SE].set(w_se.astype(f32))
    w_enc = w_enc.at[r_a:r_a + A, c_a:c_a + AE].set(w_ae.astype(f32))
    w_enc = w_enc.at[r_ps:r_ps + S, c_ps:c_ps + SE].set(w_se.astype(f32))
    w_enc = w_enc.at[r_lat:r_lat + L, c_lat:c_lat + L].set(jnp.eye(L, dtype=f32))

    b_enc = jnp.zeros((P,), f32)
    b_enc = b_enc.at[c_ns:c_ns + SE].set(b_se.astype(f32))
    b_enc = b_enc.at[c_a:c_a + AE].set(b_ae.astype(f32))
    b_enc = b_enc.at[c_ps:c_ps + SE].set(b_se.astype(f32))

    # relu floor: 0 for encoder bands / padding, -1e30 for latent pass-through
    floor = jnp.zeros((P,), f32).at[c_lat:c_lat + L].set(-1e30)

    # ---- fc_layers[0] with latent rows folded in (PyTorch concat order is
    #      [latent, hns, ha, hps]; band order in the slab differs, so permute) ----
    w1f = w1.astype(f32)
    w1_full = jnp.zeros((P, H1), f32)
    w1_full = w1_full.at[c_lat:c_lat + L].set(w1f[:L])
    w1_full = w1_full.at[c_ns:c_ns + SE].set(w1f[L:L + SE])
    w1_full = w1_full.at[c_a:c_a + AE].set(w1f[L + SE:L + SE + AE])
    w1_full = w1_full.at[c_ps:c_ps + SE].set(w1f[L + SE + AE:L + 2 * SE + AE])

    # fc_out padded to 8 output rows (row 0 is the real weight, rest zeros)
    w_out8 = jnp.zeros((8, H2), f32).at[0].set(w_out.astype(f32).reshape(-1))

    # ---- weight-stationary (transposed) operands; cast matmuls to mdt -------
    wenc_t = w_enc.T.astype(mdt)                         # (P, Kp)
    w1_t = w1_full.T.astype(mdt)                         # (H1, P)
    w2_t = w2.astype(f32).T.astype(mdt)                  # (H2, H1)
    wout_t = w_out8.astype(mdt)                          # (8, H2)
    benc_c = b_enc.reshape(P, 1)
    floor_c = floor.reshape(P, 1)
    b1_c = b1.astype(f32).reshape(H1, 1)
    b2_c = b2.astype(f32).reshape(H2, 1)
    bout_s = b_out.astype(f32).reshape(1, 1)             # scalar -> SMEM

    # ---- batch tile: large, lane-aligned; >=2 grid steps for big batches ----
    bt = min(block_batch, _round_up(B, 128))
    if B >= 1024:                      # give both v7x TensorCores work
        bt = min(bt, _round_up(pl.cdiv(B, 2), 128))
    bt = max(_round_up(bt, 128), 128)
    B_pad = _round_up(B, bt)
    grid = (B_pad // bt,)

    # ---- fused pack: tanh + cast + transpose + concat + pad, stored in mdt ----
    x_t = jnp.concatenate(
        [next_state.T.astype(mdt),
         jnp.tanh(actions.astype(f32)).T.astype(mdt),   # squash_action (tanh)
         prev_state.T.astype(mdt),
         latent_state.T.astype(mdt)], axis=0)            # (Kin, B)
    x_t = jnp.pad(x_t, ((0, Kp - Kin), (0, B_pad - B)))

    const_args = (wenc_t, benc_c, floor_c, w1_t, b1_c, w2_t, b2_c, wout_t)

    in_specs = (
        [pl.BlockSpec((Kp, bt), lambda i: (0, i))]                 # activations
        + [pl.BlockSpec(a.shape, lambda i: (0, 0)) for a in const_args]  # resident
        + [pl.BlockSpec(memory_space=pltpu.MemorySpace.SMEM)]      # scalar bias
    )

    flops = 2 * B_pad * (Kp * P + P * H1 + H1 * H2 + H2 * 8)
    bytes_accessed = (x_t.size * x_t.dtype.itemsize + B_pad * 4 + 4
                      + sum(a.size * a.dtype.itemsize for a in const_args))

    out = pl.pallas_call(
        _reward_decoder_kernel,
        grid=grid,
        in_specs=in_specs,
        out_specs=pl.BlockSpec((1, bt), lambda i: (0, i)),
        out_shape=jax.ShapeDtypeStruct((1, B_pad), f32),
        compiler_params=pltpu.CompilerParams(
            dimension_semantics=("parallel",),
            vmem_limit_bytes=vmem_limit_bytes),
        cost_estimate=pl.CostEstimate(
            flops=int(flops), transcendentals=0,
            bytes_accessed=int(bytes_accessed)),
    )(x_t, *const_args, bout_s)

    return out[0, :B].reshape(B, 1)


def init_params(key, latent_dim, state_dim, state_embed_dim,
                action_dim, action_embed_dim, layers):
    """Deterministic synthetic init (uniform, torch-Linear-like fan_in bound)."""
    def linear(k, fan_in, fan_out):
        kw, kb = jax.random.split(k)
        bound = 1.0 / jnp.sqrt(fan_in)
        w = jax.random.uniform(kw, (fan_in, fan_out), jnp.float32, -bound, bound)
        b = jax.random.uniform(kb, (fan_out,), jnp.float32, -bound, bound)
        return w, b

    keys = jax.random.split(key, 5)
    w_se, b_se = linear(keys[0], state_dim, state_embed_dim)
    w_ae, b_ae = linear(keys[1], action_dim, action_embed_dim)

    in_dim = latent_dim + state_embed_dim + action_embed_dim + state_embed_dim
    w1, b1 = linear(keys[2], in_dim, layers[0])
    w2, b2 = linear(keys[3], layers[0], layers[1])
    w_out, b_out = linear(keys[4], layers[1], 1)
    return (w_se, b_se, w_ae, b_ae, w1, b1, w2, b2, w_out, b_out)


def reference_forward(params, latent_state, next_state, prev_state, actions):
    """Pure-JAX reference mirroring the PyTorch forward."""
    (w_se, b_se, w_ae, b_ae, w1, b1, w2, b2, w_out, b_out) = params
    act = jnp.tanh(actions)                      # squash_action (norm_actions_post_sampling)
    hns = jax.nn.relu(next_state @ w_se + b_se)
    hps = jax.nn.relu(prev_state @ w_se + b_se)
    ha = jax.nn.relu(act @ w_ae + b_ae)
    h = jnp.concatenate([latent_state, hns, ha, hps], axis=-1)
    h = jax.nn.relu(h @ w1 + b1)
    h = jax.nn.relu(h @ w2 + b2)
    return h @ w_out + b_out


if __name__ == "__main__":
    # Shapes consistent with the module; batch chosen so the kernel gets a
    # 2-step "parallel" grid (exercises the multi-tile / dual-TC path) plus a
    # non-multiple-of-128 remainder handled by the fused pad.
    batch = 1500
    latent_dim = 32
    state_dim = 16
    state_embed_dim = 32
    action_dim = 4
    action_embed_dim = 16
    layers = (64, 64)

    key = jax.random.PRNGKey(0)
    k_params, k_lat, k_ns, k_ps, k_act = jax.random.split(key, 5)

    params = init_params(k_params, latent_dim, state_dim, state_embed_dim,
                         action_dim, action_embed_dim, layers)

    latent_state = jax.random.normal(k_lat, (batch, latent_dim), jnp.float32)
    next_state = jax.random.normal(k_ns, (batch, state_dim), jnp.float32)
    prev_state = jax.random.normal(k_ps, (batch, state_dim), jnp.float32)
    actions = jax.random.normal(k_act, (batch, action_dim), jnp.float32)

    ref = reference_forward(params, latent_state, next_state, prev_state, actions)

    # f32 matmul operands: tight check of the kernel structure.
    fwd_f32 = jax.jit(functools.partial(reward_decoder_forward,
                                        matmul_dtype=jnp.float32))
    out_f32 = jax.block_until_ready(
        fwd_f32(params, latent_state, next_state, prev_state, actions))
    assert out_f32.shape == (batch, 1), out_f32.shape
    assert jnp.allclose(out_f32, ref, atol=1e-3, rtol=1e-3)

    # bf16 activations + matmul operands (f32 MXU accumulation): fast path.
    fwd_bf16 = jax.jit(functools.partial(reward_decoder_forward,
                                         matmul_dtype=jnp.bfloat16))
    out_bf16 = jax.block_until_ready(
        fwd_bf16(params, latent_state, next_state, prev_state, actions))
    assert out_bf16.shape == (batch, 1), out_bf16.shape
    assert jnp.allclose(out_bf16, ref, atol=5e-2, rtol=5e-2)

    print("KERNEL_OK")
</pallas_src>

<mosaic_0001>
module attributes {stable_mosaic.version = 11 : i64} {
  func.func @_reward_decoder_kernel(%arg0: i32, %arg1: memref<128x768xf32, #tpu.memory_space<vmem>>, %arg2: memref<128x128xf32, #tpu.memory_space<vmem>>, %arg3: memref<128x1xf32, #tpu.memory_space<vmem>>, %arg4: memref<128x1xf32, #tpu.memory_space<vmem>>, %arg5: memref<64x128xf32, #tpu.memory_space<vmem>>, %arg6: memref<64x1xf32, #tpu.memory_space<vmem>>, %arg7: memref<64x64xf32, #tpu.memory_space<vmem>>, %arg8: memref<64x1xf32, #tpu.memory_space<vmem>>, %arg9: memref<8x64xf32, #tpu.memory_space<vmem>>, %arg10: memref<1x1xf32, #tpu.memory_space<smem>>, %arg11: memref<1x768xf32, #tpu.memory_space<vmem>>) attributes {dimension_semantics = [#tpu.dimension_semantics<parallel>], iteration_bounds = array<i64: 2>, scalar_prefetch = 0 : i64, scratch_operands = 0 : i64, tpu.core_type = #tpu.core_type<tc>, window_params = [{transform_indices = @transform_0, window_bounds = array<i64: 128, 768>}, {pipeline_mode = #tpu.pipeline_mode<synchronous>, transform_indices = @transform_1, window_bounds = array<i64: 128, 128>}, {pipeline_mode = #tpu.pipeline_mode<synchronous>, transform_indices = @transform_2, window_bounds = array<i64: 128, 1>}, {pipeline_mode = #tpu.pipeline_mode<synchronous>, transform_indices = @transform_3, window_bounds = array<i64: 128, 1>}, {pipeline_mode = #tpu.pipeline_mode<synchronous>, transform_indices = @transform_4, window_bounds = array<i64: 64, 128>}, {pipeline_mode = #tpu.pipeline_mode<synchronous>, transform_indices = @transform_5, window_bounds = array<i64: 64, 1>}, {pipeline_mode = #tpu.pipeline_mode<synchronous>, transform_indices = @transform_6, window_bounds = array<i64: 64, 64>}, {pipeline_mode = #tpu.pipeline_mode<synchronous>, transform_indices = @transform_7, window_bounds = array<i64: 64, 1>}, {pipeline_mode = #tpu.pipeline_mode<synchronous>, transform_indices = @transform_8, window_bounds = array<i64: 8, 64>}, {transform_indices = @transform_9, window_bounds = array<i64: 1, 1>}, {transform_indices = @transform_10, window_bounds = array<i64: 1, 768>}]} {
    %c0 = arith.constant 0 : index
    %c0_0 = arith.constant 0 : index
    %0 = vector.load %arg1[%c0, %c0_0] : memref<128x768xf32, #tpu.memory_space<vmem>>, vector<128x768xf32>
    %c0_1 = arith.constant 0 : index
    %c0_2 = arith.constant 0 : index
    %1 = vector.load %arg2[%c0_1, %c0_2] : memref<128x128xf32, #tpu.memory_space<vmem>>, vector<128x128xf32>
    %cst = arith.constant dense<0.000000e+00> : vector<128x768xf32>
    %2 = tpu.matmul %1, %0, %cst {dimension_numbers = #tpu.dot_dimension_numbers<[1], [0], [0], [1], [0, 0, 1, 1], [], []>} : vector<128x128xf32>, vector<128x768xf32>, vector<128x768xf32> -> vector<128x768xf32>
    %c0_3 = arith.constant 0 : index
    %c0_4 = arith.constant 0 : index
    %3 = vector.load %arg3[%c0_3, %c0_4] : memref<128x1xf32, #tpu.memory_space<vmem>>, vector<128x1xf32>
    %4 = vector.broadcast %3 : vector<128x1xf32> to vector<128x768xf32>
    %5 = arith.addf %2, %4 : vector<128x768xf32>
    %c0_5 = arith.constant 0 : index
    %c0_6 = arith.constant 0 : index
    %6 = vector.load %arg4[%c0_5, %c0_6] : memref<128x1xf32, #tpu.memory_space<vmem>>, vector<128x1xf32>
    %7 = vector.broadcast %6 : vector<128x1xf32> to vector<128x768xf32>
    %8 = arith.maximumf %5, %7 : vector<128x768xf32>
    %c0_7 = arith.constant 0 : index
    %c0_8 = arith.constant 0 : index
    %9 = vector.load %arg5[%c0_7, %c0_8] : memref<64x128xf32, #tpu.memory_space<vmem>>, vector<64x128xf32>
    %cst_9 = arith.constant dense<0.000000e+00> : vector<64x768xf32>
    %10 = tpu.matmul %9, %8, %cst_9 {dimension_numbers = #tpu.dot_dimension_numbers<[1], [0], [0], [1], [0, 0, 1, 1], [], []>} : vector<64x128xf32>, vector<128x768xf32>, vector<64x768xf32> -> vector<64x768xf32>
    %c0_10 = arith.constant 0 : index
    %c0_11 = arith.constant 0 : index
    %11 = vector.load %arg6[%c0_10, %c0_11] : memref<64x1xf32, #tpu.memory_space<vmem>>, vector<64x1xf32>
    %12 = vector.broadcast %11 : vector<64x1xf32> to vector<64x768xf32>
    %13 = arith.addf %10, %12 : vector<64x768xf32>
    %cst_12 = arith.constant 0.000000e+00 : f32
    %14 = vector.broadcast %cst_12 : f32 to vector<64x768xf32>
    %15 = arith.maximumf %13, %14 : vector<64x768xf32>
    %c0_13 = arith.constant 0 : index
    %c0_14 = arith.constant 0 : index
    %16 = vector.load %arg7[%c0_13, %c0_14] : memref<64x64xf32, #tpu.memory_space<vmem>>, vector<64x64xf32>
    %cst_15 = arith.constant dense<0.000000e+00> : vector<64x768xf32>
    %17 = tpu.matmul %16, %15, %cst_15 {dimension_numbers = #tpu.dot_dimension_numbers<[1], [0], [0], [1], [0, 0, 1, 1], [], []>} : vector<64x64xf32>, vector<64x768xf32>, vector<64x768xf32> -> vector<64x768xf32>
    %c0_16 = arith.constant 0 : index
    %c0_17 = arith.constant 0 : index
    %18 = vector.load %arg8[%c0_16, %c0_17] : memref<64x1xf32, #tpu.memory_space<vmem>>, vector<64x1xf32>
    %19 = vector.broadcast %18 : vector<64x1xf32> to vector<64x768xf32>
    %20 = arith.addf %17, %19 : vector<64x768xf32>
    %cst_18 = arith.constant 0.000000e+00 : f32
    %21 = vector.broadcast %cst_18 : f32 to vector<64x768xf32>
    %22 = arith.maximumf %20, %21 : vector<64x768xf32>
    %c0_19 = arith.constant 0 : index
    %c0_20 = arith.constant 0 : index
    %23 = vector.load %arg9[%c0_19, %c0_20] : memref<8x64xf32, #tpu.memory_space<vmem>>, vector<8x64xf32>
    %cst_21 = arith.constant dense<0.000000e+00> : vector<8x768xf32>
    %24 = tpu.matmul %23, %22, %cst_21 {dimension_numbers = #tpu.dot_dimension_numbers<[1], [0], [0], [1], [0, 0, 1, 1], [], []>} : vector<8x64xf32>, vector<64x768xf32>, vector<8x768xf32> -> vector<8x768xf32>
    %25 = vector.extract_strided_slice %24 {offsets = [0, 0], sizes = [1, 768], strides = [1, 1]} : vector<8x768xf32> to vector<1x768xf32>
    %c0_22 = arith.constant 0 : index
    %c0_23 = arith.constant 0 : index
    %26 = memref.load %arg10[%c0_22, %c0_23] : memref<1x1xf32, #tpu.memory_space<smem>>
    %27 = vector.broadcast %26 : f32 to vector<1x768xf32>
    %28 = arith.addf %25, %27 : vector<1x768xf32>
    %c0_24 = arith.constant 0 : index
    %c0_25 = arith.constant 0 : index
    %29 = vector.load %arg11[%c0_24, %c0_25] : memref<1x768xf32, #tpu.memory_space<vmem>>, vector<1x768xf32>
    tpu.vector_store %arg11[%c0_24, %c0_25], %28 {strides = array<i32>} : memref<1x768xf32, #tpu.memory_space<vmem>>, vector<1x768xf32>,
    return
  }
  func.func @transform_0(%arg0: i32) -> (i32, i32) {
    %c0_i32 = arith.constant 0 : i32
    %c0_i32_0 = arith.constant 0 : i32
    return %c0_i32, %arg0 : i32, i32
  }
  func.func @transform_1(%arg0: i32) -> (i32, i32) {
    %c0_i32 = arith.constant 0 : i32
    %c0_i32_0 = arith.constant 0 : i32
    %c0_i32_1 = arith.constant 0 : i32
    return %c0_i32, %c0_i32_0 : i32, i32
  }
  func.func @transform_2(%arg0: i32) -> (i32, i32) {
    %c0_i32 = arith.constant 0 : i32
    %c0_i32_0 = arith.constant 0 : i32
    %c0_i32_1 = arith.constant 0 : i32
    return %c0_i32, %c0_i32_0 : i32, i32
  }
  func.func @transform_3(%arg0: i32) -> (i32, i32) {
    %c0_i32 = arith.constant 0 : i32
    %c0_i32_0 = arith.constant 0 : i32
    %c0_i32_1 = arith.constant 0 : i32
    return %c0_i32, %c0_i32_0 : i32, i32
  }
  func.func @transform_4(%arg0: i32) -> (i32, i32) {
    %c0_i32 = arith.constant 0 : i32
    %c0_i32_0 = arith.constant 0 : i32
    %c0_i32_1 = arith.constant 0 : i32
    return %c0_i32, %c0_i32_0 : i32, i32
  }
  func.func @transform_5(%arg0: i32) -> (i32, i32) {
    %c0_i32 = arith.constant 0 : i32
    %c0_i32_0 = arith.constant 0 : i32
    %c0_i32_1 = arith.constant 0 : i32
    return %c0_i32, %c0_i32_0 : i32, i32
  }
  func.func @transform_6(%arg0: i32) -> (i32, i32) {
    %c0_i32 = arith.constant 0 : i32
    %c0_i32_0 = arith.constant 0 : i32
    %c0_i32_1 = arith.constant 0 : i32
    return %c0_i32, %c0_i32_0 : i32, i32
  }
  func.func @transform_7(%arg0: i32) -> (i32, i32) {
    %c0_i32 = arith.constant 0 : i32
    %c0_i32_0 = arith.constant 0 : i32
    %c0_i32_1 = arith.constant 0 : i32
    return %c0_i32, %c0_i32_0 : i32, i32
  }
  func.func @transform_8(%arg0: i32) -> (i32, i32) {
    %c0_i32 = arith.constant 0 : i32
    %c0_i32_0 = arith.constant 0 : i32
    %c0_i32_1 = arith.constant 0 : i32
    return %c0_i32, %c0_i32_0 : i32, i32
  }
  func.func @transform_9(%arg0: i32) -> (i32, i32) {
    %c0_i32 = arith.constant 0 : i32
    %c0_i32_0 = arith.constant 0 : i32
    %c0_i32_1 = arith.constant 0 : i32
    return %c0_i32, %c0_i32_0 : i32, i32
  }
  func.func @transform_10(%arg0: i32) -> (i32, i32) {
    %c0_i32 = arith.constant 0 : i32
    %c0_i32_0 = arith.constant 0 : i32
    return %c0_i32, %arg0 : i32, i32
  }
}

</mosaic_0001>

<llo_original>
// kernel: reward_decoder_forward.1
$region0: #{reward_decoder_forward.1}
  #allocation0 [shape = 'u32[]', space=smem, size = 0x4, offset = 0x4, fixed_abs, tag = 'smem constant byte address 0x4 - core index']
  #allocation1 [shape = 'u32[144,128]{1,0:T(1,128)}', space=vmem, size = 0x12000, scoped, tag = 'internal scratch']
  #allocation2 [shape = 'f32[1,1]{1,0:T(1,128)S(6)}', space=smem, size = 0x200, scoped, tag = 'scoped memory for reward_decoder_forward.1']
  %s0 = inlined_call_operand.vmem [shape: f32[128,1536], index: 0, kind: input, shape index: {}]
  %s1 = inlined_call_operand.vmem [shape: f32[128,128], index: 1, kind: input, shape index: {}]
  %s2 = inlined_call_operand.vmem [shape: f32[128,1], index: 2, kind: input, shape index: {}]
  %s3 = inlined_call_operand.vmem [shape: f32[128,1], index: 3, kind: input, shape index: {}]
  %s4 = inlined_call_operand.vmem [shape: f32[64,128], index: 4, kind: input, shape index: {}]
  %s5 = inlined_call_operand.vmem [shape: f32[64,1], index: 5, kind: input, shape index: {}]
  %s6 = inlined_call_operand.vmem [shape: f32[64,64], index: 6, kind: input, shape index: {}]
  %s7 = inlined_call_operand.vmem [shape: f32[64,1], index: 7, kind: input, shape index: {}]
  %s8 = inlined_call_operand.vmem [shape: f32[8,64], index: 8, kind: input, shape index: {}]
  %s9 = inlined_call_operand.<no memory space> [shape: f32[1,1], index: 9, kind: input, shape index: {}]
  %s10 = inlined_call_operand.vmem [shape: f32[1,1536], index: 10, kind: output, shape index: {}]
  %s11 = sld [smem:[#allocation0]]
  $region96: #{reward_decoder_forward.1} parent=0
    _
  %s13 = ssub.s32 1, %s11
  %s14 = scalar_select 0, %s13, %s11
  %15 = sst [smem:[#allocation2]] %s9
  $region1: #{reward_decoder_forward.1} parent=0
    #allocation3 [shape = 'u8[786432]{0}', space=vmem, size = 0xc0000, scoped, tag = 'input window, operand 0']
    loop: start=0, step=1, limit=4
    $region2: #{reward_decoder_forward.1} parent=1 // loop_pre_header
      _
    $region3: #{reward_decoder_forward.1} parent=1 // loop_header
      %s17 = sphi 0, %s21
      %p18 = scmp.ge.s32.totalorder %s17, 4
      %s27 = sphi 0, %s29
      %s30 = sphi 0, %s27
      %s31 = sphi 0, %s30
      %s47 = sphi 0, %s31
      %s51 = sphi 0, %s51
      %s53 = sphi 0, %s51
      %s54 = sphi 0, %s53
      %s68 = sphi 0, %s54
      %s72 = sphi 0, %s72
      %s74 = sphi 0, %s72
      %s75 = sphi 0, %s74
      %s89 = sphi 0, %s75
      %s93 = sphi 0, %s93
      %s95 = sphi 0, %s93
      %s96 = sphi 0, %s95
      %s110 = sphi 0, %s96
      %s114 = sphi 0, %s114
      %s116 = sphi 0, %s114
      %s117 = sphi 0, %s116
      %s131 = sphi 0, %s117
      %s135 = sphi 0, %s135
      %s137 = sphi 0, %s135
      %s138 = sphi 0, %s137
      %s152 = sphi 0, %s138
      %s156 = sphi 0, %s156
      %s158 = sphi 0, %s156
      %s159 = sphi 0, %s158
      %s173 = sphi 0, %s159
      %s177 = sphi 0, %s177
      %s179 = sphi 0, %s177
      %s180 = sphi 0, %s179
      %s194 = sphi 0, %s180
      %s198 = sphi 0, %s198
      %s200 = sphi 0, %s198
      %s201 = sphi 0, %s200
      %s215 = sphi 0, %s201
      %s219 = sphi 0, %s219
      %s221 = sphi 0, %s219
      %s222 = sphi 0, %s221
      %s236 = sphi 0, %s222
      %s242 = sphi 0, %s244
      %s245 = sphi 0, %s242
      %s246 = sphi 0, %s245
      %s262 = sphi 0, %s246
    $region4: #{reward_decoder_forward.1} parent=1 // loop_header_branch
      %20 = sbr.rel (%p18) target = $region8
    $region5: #{reward_decoder_forward.1} parent=1 // loop_body
      %s22 = ssub.s32 %s17, 1
      %s23 = ssub.s32 %s17, 2
      %s24 = sadd.s32 %s17, 1
      %s25 = ssub.s32 %s17, %s24
      %p26 = scmp.eq.s32.totalorder %s25, 0
      %s28 = sadd.s32 %s27, 1
      %s29 = scalar_select %p26, %s27, %s28
      %p32 = pneg %p26
      %p33 = scmp.eq.s32.totalorder %s17, 1
      %p34 = por %p32, %p33
      %p35 = scmp.ne.s32.totalorder %s27, %s30
      %p36 = scmp.eq.s32.totalorder %s17, 0
      %p37 = por %p35, %p36
      %p38 = scmp.ne.s32.totalorder %s27, %s30
      %p39 = scmp.eq.s32.totalorder %s22, 1
      %p40 = por %p38, %p39
      %p41 = scmp.ne.s32.totalorder %s30, %s31
      %p42 = scmp.eq.s32.totalorder %s22, 0
      %p43 = por %p41, %p42
      %p44 = scmp.ne.s32.totalorder %s30, %s31
      %p45 = scmp.eq.s32.totalorder %s23, 1
      %p46 = por %p44, %p45
      %p48 = scmp.ne.s32.totalorder %s31, %s47
      %p49 = scmp.eq.s32.totalorder %s23, 0
      %p50 = por %p48, %p49
      %s52 = sadd.s32 %s51, 1
      %p55 = scmp.eq.s32.totalorder %s17, 1
      %p56 = scmp.ne.s32.totalorder %s51, %s53
      %p57 = scmp.eq.s32.totalorder %s17, 0
      %p58 = por %p56, %p57
      %p59 = scmp.ne.s32.totalorder %s51, %s53
      %p60 = scmp.eq.s32.totalorder %s22, 1
      %p61 = por %p59, %p60
      %p62 = scmp.ne.s32.totalorder %s53, %s54
      %p63 = scmp.eq.s32.totalorder %s22, 0
      %p64 = por %p62, %p63
      %p65 = scmp.ne.s32.totalorder %s53, %s54
      %p66 = scmp.eq.s32.totalorder %s23, 1
      %p67 = por %p65, %p66
      %p69 = scmp.ne.s32.totalorder %s54, %s68
      %p70 = scmp.eq.s32.totalorder %s23, 0
      %p71 = por %p69, %p70
      %s73 = sadd.s32 %s72, 1
      %p76 = scmp.eq.s32.totalorder %s17, 1
      %p77 = scmp.ne.s32.totalorder %s72, %s74
      %p78 = scmp.eq.s32.totalorder %s17, 0
      %p79 = por %p77, %p78
      %p80 = scmp.ne.s32.totalorder %s72, %s74
      %p81 = scmp.eq.s32.totalorder %s22, 1
      %p82 = por %p80, %p81
      %p83 = scmp.ne.s32.totalorder %s74, %s75
      %p84 = scmp.eq.s32.totalorder %s22, 0
      %p85 = por %p83, %p84
      %p86 = scmp.ne.s32.totalorder %s74, %s75
      %p87 = scmp.eq.s32.totalorder %s23, 1
      %p88 = por %p86, %p87
      %p90 = scmp.ne.s32.totalorder %s75, %s89
      %p91 = scmp.eq.s32.totalorder %s23, 0
      %p92 = por %p90, %p91
      %s94 = sadd.s32 %s93, 1
      %p97 = scmp.eq.s32.totalorder %s17, 1
      %p98 = scmp.ne.s32.totalorder %s93, %s95
      %p99 = scmp.eq.s32.totalorder %s17, 0
      %p100 = por %p98, %p99
      %p101 = scmp.ne.s32.totalorder %s93, %s95
      %p102 = scmp.eq.s32.totalorder %s22, 1
      %p103 = por %p101, %p102
      %p104 = scmp.ne.s32.totalorder %s95, %s96
      %p105 = scmp.eq.s32.totalorder %s22, 0
      %p106 = por %p104, %p105
      %p107 = scmp.ne.s32.totalorder %s95, %s96
      %p108 = scmp.eq.s32.totalorder %s23, 1
      %p109 = por %p107, %p108
      %p111 = scmp.ne.s32.totalorder %s96, %s110
      %p112 = scmp.eq.s32.totalorder %s23, 0
      %p113 = por %p111, %p112
      %s115 = sadd.s32 %s114, 1
      %p118 = scmp.eq.s32.totalorder %s17, 1
      %p119 = scmp.ne.s32.totalorder %s114, %s116
      %p120 = scmp.eq.s32.totalorder %s17, 0
      %p121 = por %p119, %p120
      %p122 = scmp.ne.s32.totalorder %s114, %s116
      %p123 = scmp.eq.s32.totalorder %s22, 1
      %p124 = por %p122, %p123
      %p125 = scmp.ne.s32.totalorder %s116, %s117
      %p126 = scmp.eq.s32.totalorder %s22, 0
      %p127 = por %p125, %p126
      %p128 = scmp.ne.s32.totalorder %s116, %s117
      %p129 = scmp.eq.s32.totalorder %s23, 1
      %p130 = por %p128, %p129
      %p132 = scmp.ne.s32.totalorder %s117, %s131
      %p133 = scmp.eq.s32.totalorder %s23, 0
      %p134 = por %p132, %p133
      %s136 = sadd.s32 %s135, 1
      %p139 = scmp.eq.s32.totalorder %s17, 1
      %p140 = scmp.ne.s32.totalorder %s135, %s137
      %p141 = scmp.eq.s32.totalorder %s17, 0
      %p142 = por %p140, %p141
      %p143 = scmp.ne.s32.totalorder %s135, %s137
      %p144 = scmp.eq.s32.totalorder %s22, 1
      %p145 = por %p143, %p144
      %p146 = scmp.ne.s32.totalorder %s137, %s138
      %p147 = scmp.eq.s32.totalorder %s22, 0
      %p148 = por %p146, %p147
      %p149 = scmp.ne.s32.totalorder %s137, %s138
      %p150 = scmp.eq.s32.totalorder %s23, 1
      %p151 = por %p149, %p150
      %p153 = scmp.ne.s32.totalorder %s138, %s152
      %p154 = scmp.eq.s32.totalorder %s23, 0
      %p155 = por %p153, %p154
      %s157 = sadd.s32 %s156, 1
      %p160 = scmp.eq.s32.totalorder %s17, 1
      %p161 = scmp.ne.s32.totalorder %s156, %s158
      %p162 = scmp.eq.s32.totalorder %s17, 0
      %p163 = por %p161, %p162
      %p164 = scmp.ne.s32.totalorder %s156, %s158
      %p165 = scmp.eq.s32.totalorder %s22, 1
      %p166 = por %p164, %p165
      %p167 = scmp.ne.s32.totalorder %s158, %s159
      %p168 = scmp.eq.s32.totalorder %s22, 0
      %p169 = por %p167, %p168
      %p170 = scmp.ne.s32.totalorder %s158, %s159
      %p171 = scmp.eq.s32.totalorder %s23, 1
      %p172 = por %p170, %p171
      %p174 = scmp.ne.s32.totalorder %s159, %s173
      %p175 = scmp.eq.s32.totalorder %s23, 0
      %p176 = por %p174, %p175
      %s178 = sadd.s32 %s177, 1
      %p181 = scmp.eq.s32.totalorder %s17, 1
      %p182 = scmp.ne.s32.totalorder %s177, %s179
      %p183 = scmp.eq.s32.totalorder %s17, 0
      %p184 = por %p182, %p183
      %p185 = scmp.ne.s32.totalorder %s177, %s179
      %p186 = scmp.eq.s32.totalorder %s22, 1
      %p187 = por %p185, %p186
      %p188 = scmp.ne.s32.totalorder %s179, %s180
      %p189 = scmp.eq.s32.totalorder %s22, 0
      %p190 = por %p188, %p189
      %p191 = scmp.ne.s32.totalorder %s179, %s180
      %p192 = scmp.eq.s32.totalorder %s23, 1
      %p193 = por %p191, %p192
      %p195 = scmp.ne.s32.totalorder %s180, %s194
      %p196 = scmp.eq.s32.totalorder %s23, 0
      %p197 = por %p195, %p196
      %s199 = sadd.s32 %s198, 1
      %p202 = scmp.eq.s32.totalorder %s17, 1
      %p203 = scmp.ne.s32.totalorder %s198, %s200
      %p204 = scmp.eq.s32.totalorder %s17, 0
      %p205 = por %p203, %p204
      %p206 = scmp.ne.s32.totalorder %s198, %s200
      %p207 = scmp.eq.s32.totalorder %s22, 1
      %p208 = por %p206, %p207
      %p209 = scmp.ne.s32.totalorder %s200, %s201
      %p210 = scmp.eq.s32.totalorder %s22, 0
      %p211 = por %p209, %p210
      %p212 = scmp.ne.s32.totalorder %s200, %s201
      %p213 = scmp.eq.s32.totalorder %s23, 1
      %p214 = por %p212, %p213
      %p216 = scmp.ne.s32.totalorder %s201, %s215
      %p217 = scmp.eq.s32.totalorder %s23, 0
      %p218 = por %p216, %p217
      %s220 = sadd.s32 %s219, 1
      %p223 = scmp.eq.s32.totalorder %s17, 1
      %p224 = scmp.ne.s32.totalorder %s219, %s221
      %p225 = scmp.eq.s32.totalorder %s17, 0
      %p226 = por %p224, %p225
      %p227 = scmp.ne.s32.totalorder %s219, %s221
      %p228 = scmp.eq.s32.totalorder %s22, 1
      %p229 = por %p227, %p228
      %p230 = scmp.ne.s32.totalorder %s221, %s222
      %p231 = scmp.eq.s32.totalorder %s22, 0
      %p232 = por %p230, %p231
      %p233 = scmp.ne.s32.totalorder %s221, %s222
      %p234 = scmp.eq.s32.totalorder %s23, 1
      %p235 = por %p233, %p234
      %p237 = scmp.ne.s32.totalorder %s222, %s236
      %p238 = scmp.eq.s32.totalorder %s23, 0
      %p239 = por %p237, %p238
      %s240 = ssub.s32 %s17, %s24
      %p241 = scmp.eq.s32.totalorder %s240, 0
      %s243 = sadd.s32 %s242, 1
      %s244 = scalar_select %p241, %s242, %s243
      %p247 = pneg %p241
      %p248 = scmp.eq.s32.totalorder %s17, 1
      %p249 = por %p247, %p248
      %p250 = scmp.ne.s32.totalorder %s242, %s245
      %p251 = scmp.eq.s32.totalorder %s17, 0
      %p252 = por %p250, %p251
      %p253 = scmp.ne.s32.totalorder %s242, %s245
      %p254 = scmp.eq.s32.totalorder %s22, 1
      %p255 = por %p253, %p254
      %p256 = scmp.ne.s32.totalorder %s245, %s246
      %p257 = scmp.eq.s32.totalorder %s22, 0
      %p258 = por %p256, %p257
      %p259 = scmp.ne.s32.totalorder %s245, %s246
      %p260 = scmp.eq.s32.totalorder %s23, 1
      %p261 = por %p259, %p260
      %p263 = scmp.ne.s32.totalorder %s246, %s262
      %p264 = scmp.eq.s32.totalorder %s23, 0
      %p265 = por %p263, %p264
      %p266 = scmp.le.s32.totalorder 1, %s17
      %p267 = scmp.lt.s32.totalorder %s17, 3
      %p268 = pnand %p266, %p267
      %p269 = pneg %p268
      // Predicated region
      $region9: #{reward_decoder_forward.1} parent=5 // pred_check
        _
      $region10: #{reward_decoder_forward.1} parent=5 // pred_check_branch
        %271 = sbr.rel (%p268) target = $region12
      $region11: #{reward_decoder_forward.1} parent=5 // pred_region
        %s272 = ssub.s32 %s17, 1
        // Predicated region
        $region13: #{reward_decoder_forward.1} parent=11 // pred_check
          %p273 = pneg %p64
        $region14: #{reward_decoder_forward.1} parent=11 // pred_check_branch
          %275 = sbr.rel (%p273) target = $region16
        $region15: #{reward_decoder_forward.1} parent=11 // pred_region
          _
        $region16: #{reward_decoder_forward.1} parent=11 // pred_fallthru
          _
        // Predicated region
        $region17: #{reward_decoder_forward.1} parent=11 // pred_check
          %p276 = pneg %p85
        $region18: #{reward_decoder_forward.1} parent=11 // pred_check_branch
          %278 = sbr.rel (%p276) target = $region20
        $region19: #{reward_decoder_forward.1} parent=11 // pred_region
          _
        $region20: #{reward_decoder_forward.1} parent=11 // pred_fallthru
          _
        // Predicated region
        $region21: #{reward_decoder_forward.1} parent=11 // pred_check
          %p279 = pneg %p106
        $region22: #{reward_decoder_forward.1} parent=11 // pred_check_branch
          %281 = sbr.rel (%p279) target = $region24
        $region23: #{reward_decoder_forward.1} parent=11 // pred_region
          _
        $region24: #{reward_decoder_forward.1} parent=11 // pred_fallthru
          _
        // Predicated region
        $region25: #{reward_decoder_forward.1} parent=11 // pred_check
          %p282 = pneg %p127
        $region26: #{reward_decoder_forward.1} parent=11 // pred_check_branch
          %284 = sbr.rel (%p282) target = $region28
        $region27: #{reward_decoder_forward.1} parent=11 // pred_region
          _
        $region28: #{reward_decoder_forward.1} parent=11 // pred_fallthru
          _
        // Predicated region
        $region29: #{reward_decoder_forward.1} parent=11 // pred_check
          %p285 = pneg %p148
        $region30: #{reward_decoder_forward.1} parent=11 // pred_check_branch
          %287 = sbr.rel (%p285) target = $region32
        $region31: #{reward_decoder_forward.1} parent=11 // pred_region
          _
        $region32: #{reward_decoder_forward.1} parent=11 // pred_fallthru
          _
        // Predicated region
        $region33: #{reward_decoder_forward.1} parent=11 // pred_check
          %p288 = pneg %p169
        $region34: #{reward_decoder_forward.1} parent=11 // pred_check_branch
          %290 = sbr.rel (%p288) target = $region36
        $region35: #{reward_decoder_forward.1} parent=11 // pred_region
          _
        $region36: #{reward_decoder_forward.1} parent=11 // pred_fallthru
          _
        // Predicated region
        $region37: #{reward_decoder_forward.1} parent=11 // pred_check
          %p291 = pneg %p190
        $region38: #{reward_decoder_forward.1} parent=11 // pred_check_branch
          %293 = sbr.rel (%p291) target = $region40
        $region39: #{reward_decoder_forward.1} parent=11 // pred_region
          _
        $region40: #{reward_decoder_forward.1} parent=11 // pred_fallthru
          _
        // Predicated region
        $region41: #{reward_decoder_forward.1} parent=11 // pred_check
          %p294 = pneg %p211
        $region42: #{reward_decoder_forward.1} parent=11 // pred_check_branch
          %296 = sbr.rel (%p294) target = $region44
        $region43: #{reward_decoder_forward.1} parent=11 // pred_region
          _
        $region44: #{reward_decoder_forward.1} parent=11 // pred_fallthru
          _
        // Predicated region
        $region45: #{reward_decoder_forward.1} parent=11 // pred_check
          %p297 = pneg %p232
        $region46: #{reward_decoder_forward.1} parent=11 // pred_check_branch
          %299 = sbr.rel (%p297) target = $region48
        $region47: #{reward_decoder_forward.1} parent=11 // pred_region
          _
        $region48: #{reward_decoder_forward.1} parent=11 // pred_fallthru
          _
      $region12: #{reward_decoder_forward.1} parent=5 // pred_fallthru
        _
      %p300 = scmp.lt.s32.totalorder %s17, 2
      // Predicated region
      $region49: #{reward_decoder_forward.1} parent=5 // pred_check
        %p301 = pneg %p300
      $region50: #{reward_decoder_forward.1} parent=5 // pred_check_branch
        %303 = sbr.rel (%p301) target = $region52
      $region51: #{reward_decoder_forward.1} parent=5 // pred_region
        // Predicated region
        $region53: #{reward_decoder_forward.1} parent=51 // pred_check
          %p304 = pneg %p37
        $region54: #{reward_decoder_forward.1} parent=51 // pred_check_branch
          %306 = sbr.rel (%p304) target = $region56
        $region55: #{reward_decoder_forward.1} parent=51 // pred_region
          %s307 = sand.u32 %s27, 1
          %s308 = sand.u32 %s27, 1
          %s309 = smul.addr %s308, 768
          %s310 = scalar_lea.vmem [#allocation3], %s309
          %s311 = smul.u32 6, %s17
          %s312 = smul.addr %s311, 8
          %s313 = scalar_lea.vmem %s0, %s312
          // Predicated region
          $region57: #{reward_decoder_forward.1} parent=55 // pred_check
            _
          $region58: #{reward_decoder_forward.1} parent=55 // pred_check_branch
            %315 = sbr.rel (0) target = $region60
          $region59: #{reward_decoder_forward.1} parent=55 // pred_region
            // Predicated region
            $region61: #{reward_decoder_forward.1} parent=59 // pred_check
              _
            $region62: #{reward_decoder_forward.1} parent=59 // pred_check_branch
              %317 = sbr.rel (0) target = $region64
            $region63: #{reward_decoder_forward.1} parent=59 // pred_region
              loop: start=0, step=1, limit=1
              $region65: #{reward_decoder_forward.1} parent=63 // loop_pre_header
                _
              $region66: #{reward_decoder_forward.1} parent=63 // loop_header
                %s319 = sphi 0, %s323
                %p320 = scmp.ge.s32.totalorder %s319, 1
                %s324 = sphi %s313, %s313
                %s325 = sphi %s310, %s310
              $region67: #{reward_decoder_forward.1} parent=63 // loop_header_branch
                %322 = sbr.rel (%p320) target = $region71
              $region68: #{reward_decoder_forward.1} parent=63 // loop_body
                %v326 = vld [vmem:[%s324] sm:$0xff]
                %327 = vst [vmem:[%s325] sm:$0xff] %v326
                %v328 = vld [vmem:[%s324 + $0x8] sm:$0xff]
                %329 = vst [vmem:[%s325 + $0x8] sm:$0xff] %v328
                %v330 = vld [vmem:[%s324 + $0x10] sm:$0xff]
                %331 = vst [vmem:[%s325 + $0x10] sm:$0xff] %v330
                %v332 = vld [vmem:[%s324 + $0x18] sm:$0xff]
                %333 = vst [vmem:[%s325 + $0x18] sm:$0xff] %v332
                %v334 = vld [vmem:[%s324 + $0x20] sm:$0xff]
                %335 = vst [vmem:[%s325 + $0x20] sm:$0xff] %v334
                %v336 = vld [vmem:[%s324 + $0x28] sm:$0xff]
                %337 = vst [vmem:[%s325 + $0x28] sm:$0xff] %v336
                %v338 = vld [vmem:[%s324 + $0x60] sm:$0xff]
                %339 = vst [vmem:[%s325 + $0x30] sm:$0xff] %v338
                %v340 = vld [vmem:[%s324 + $0x68] sm:$0xff]
                %341 = vst [vmem:[%s325 + $0x38] sm:$0xff] %v340
                %v342 = vld [vmem:[%s324 + $0x70] sm:$0xff]
                %343 = vst [vmem:[%s325 + $0x40] sm:$0xff] %v342
                %v344 = vld [vmem:[%s324 + $0x78] sm:$0xff]
                %345 = vst [vmem:[%s325 + $0x48] sm:$0xff] %v344
                %v346 = vld [vmem:[%s324 + $0x80] sm:$0xff]
                %347 = vst [vmem:[%s325 + $0x50] sm:$0xff] %v346
                %v348 = vld [vmem:[%s324 + $0x88] sm:$0xff]
                %349 = vst [vmem:[%s325 + $0x58] sm:$0xff] %v348
                %v350 = vld [vmem:[%s324 + $0xc0] sm:$0xff]
                %351 = vst [vmem:[%s325 + $0x60] sm:$0xff] %v350
                %v352 = vld [vmem:[%s324 + $0xc8] sm:$0xff]
                %353 = vst [vmem:[%s325 + $0x68] sm:$0xff] %v352
                %v354 = vld [vmem:[%s324 + $0xd0] sm:$0xff]
                %355 = vst [vmem:[%s325 + $0x70] sm:$0xff] %v354
                %v356 = vld [vmem:[%s324 + $0xd8] sm:$0xff]
                %357 = vst [vmem:[%s325 + $0x78] sm:$0xff] %v356
                %v358 = vld [vmem:[%s324 + $0xe0] sm:$0xff]
                %359 = vst [vmem:[%s325 + $0x80] sm:$0xff] %v358
                %v360 = vld [vmem:[%s324 + $0xe8] sm:$0xff]
                %361 = vst [vmem:[%s325 + $0x88] sm:$0xff] %v360
                %v362 = vld [vmem:[%s324 + $0x120] sm:$0xff]
                %363 = vst [vmem:[%s325 + $0x90] sm:$0xff] %v362
                %v364 = vld [vmem:[%s324 + $0x128] sm:$0xff]
                %365 = vst [vmem:[%s325 + $0x98] sm:$0xff] %v364
                %v366 = vld [vmem:[%s324 + $0x130] sm:$0xff]
                %367 = vst [vmem:[%s325 + $0xa0] sm:$0xff] %v366
                %v368 = vld [vmem:[%s324 + $0x138] sm:$0xff]
                %369 = vst [vmem:[%s325 + $0xa8] sm:$0xff] %v368
                %v370 = vld [vmem:[%s324 + $0x140] sm:$0xff]
                %371 = vst [vmem:[%s325 + $0xb0] sm:$0xff] %v370
                %v372 = vld [vmem:[%s324 + $0x148] sm:$0xff]
                %373 = vst [vmem:[%s325 + $0xb8] sm:$0xff] %v372
                %v374 = vld [vmem:[%s324 + $0x180] sm:$0xff]
                %375 = vst [vmem:[%s325 + $0xc0] sm:$0xff] %v374
                %v376 = vld [vmem:[%s324 + $0x188] sm:$0xff]
                %377 = vst [vmem:[%s325 + $0xc8] sm:$0xff] %v376
                %v378 = vld [vmem:[%s324 + $0x190] sm:$0xff]
                %379 = vst [vmem:[%s325 + $0xd0] sm:$0xff] %v378
                %v380 = vld [vmem:[%s324 + $0x198] sm:$0xff]
                %381 = vst [vmem:[%s325 + $0xd8] sm:$0xff] %v380
                %v382 = vld [vmem:[%s324 + $0x1a0] sm:$0xff]
                %383 = vst [vmem:[%s325 + $0xe0] sm:$0xff] %v382
                %v384 = vld [vmem:[%s324 + $0x1a8] sm:$0xff]
                %385 = vst [vmem:[%s325 + $0xe8] sm:$0xff] %v384
                %v386 = vld [vmem:[%s324 + $0x1e0] sm:$0xff]
                %387 = vst [vmem:[%s325 + $0xf0] sm:$0xff] %v386
                %v388 = vld [vmem:[%s324 + $0x1e8] sm:$0xff]
                %389 = vst [vmem:[%s325 + $0xf8] sm:$0xff] %v388
                %v390 = vld [vmem:[%s324 + $0x1f0] sm:$0xff]
                %391 = vst [vmem:[%s325 + $0x100] sm:$0xff] %v390
                %v392 = vld [vmem:[%s324 + $0x1f8] sm:$0xff]
                %393 = vst [vmem:[%s325 + $0x108] sm:$0xff] %v392
                %v394 = vld [vmem:[%s324 + $0x200] sm:$0xff]
                %395 = vst [vmem:[%s325 + $0x110] sm:$0xff] %v394
                %v396 = vld [vmem:[%s324 + $0x208] sm:$0xff]
                %397 = vst [vmem:[%s325 + $0x118] sm:$0xff] %v396
                %v398 = vld [vmem:[%s324 + $0x240] sm:$0xff]
                %399 = vst [vmem:[%s325 + $0x120] sm:$0xff] %v398
                %v400 = vld [vmem:[%s324 + $0x248] sm:$0xff]
                %401 = vst [vmem:[%s325 + $0x128] sm:$0xff] %v400
                %v402 = vld [vmem:[%s324 + $0x250] sm:$0xff]
                %403 = vst [vmem:[%s325 + $0x130] sm:$0xff] %v402
                %v404 = vld [vmem:[%s324 + $0x258] sm:$0xff]
                %405 = vst [vmem:[%s325 + $0x138] sm:$0xff] %v404
                %v406 = vld [vmem:[%s324 + $0x260] sm:$0xff]
                %407 = vst [vmem:[%s325 + $0x140] sm:$0xff] %v406
                %v408 = vld [vmem:[%s324 + $0x268] sm:$0xff]
                %409 = vst [vmem:[%s325 + $0x148] sm:$0xff] %v408
                %v410 = vld [vmem:[%s324 + $0x2a0] sm:$0xff]
                %411 = vst [vmem:[%s325 + $0x150] sm:$0xff] %v410
                %v412 = vld [vmem:[%s324 + $0x2a8] sm:$0xff]
                %413 = vst [vmem:[%s325 + $0x158] sm:$0xff] %v412
                %v414 = vld [vmem:[%s324 + $0x2b0] sm:$0xff]
                %415 = vst [vmem:[%s325 + $0x160] sm:$0xff] %v414
                %v416 = vld [vmem:[%s324 + $0x2b8] sm:$0xff]
                %417 = vst [vmem:[%s325 + $0x168] sm:$0xff] %v416
                %v418 = vld [vmem:[%s324 + $0x2c0] sm:$0xff]
                %419 = vst [vmem:[%s325 + $0x170] sm:$0xff] %v418
                %v420 = vld [vmem:[%s324 + $0x2c8] sm:$0xff]
                %421 = vst [vmem:[%s325 + $0x178] sm:$0xff] %v420
                %v422 = vld [vmem:[%s324 + $0x300] sm:$0xff]
                %423 = vst [vmem:[%s325 + $0x180] sm:$0xff] %v422
                %v424 = vld [vmem:[%s324 + $0x308] sm:$0xff]
                %425 = vst [vmem:[%s325 + $0x188] sm:$0xff] %v424
                %v426 = vld [vmem:[%s324 + $0x310] sm:$0xff]
                %427 = vst [vmem:[%s325 + $0x190] sm:$0xff] %v426
                %v428 = vld [vmem:[%s324 + $0x318] sm:$0xff]
                %429 = vst [vmem:[%s325 + $0x198] sm:$0xff] %v428
                %v430 = vld [vmem:[%s324 + $0x320] sm:$0xff]
                %431 = vst [vmem:[%s325 + $0x1a0] sm:$0xff] %v430
                %v432 = vld [vmem:[%s324 + $0x328] sm:$0xff]
                %433 = vst [vmem:[%s325 + $0x1a8] sm:$0xff] %v432
                %v434 = vld [vmem:[%s324 + $0x360] sm:$0xff]
                %435 = vst [vmem:[%s325 + $0x1b0] sm:$0xff] %v434
                %v436 = vld [vmem:[%s324 + $0x368] sm:$0xff]
                %437 = vst [vmem:[%s325 + $0x1b8] sm:$0xff] %v436
                %v438 = vld [vmem:[%s324 + $0x370] sm:$0xff]
                %439 = vst [vmem:[%s325 + $0x1c0] sm:$0xff] %v438
                %v440 = vld [vmem:[%s324 + $0x378] sm:$0xff]
                %441 = vst [vmem:[%s325 + $0x1c8] sm:$0xff] %v440
                %v442 = vld [vmem:[%s324 + $0x380] sm:$0xff]
                %443 = vst [vmem:[%s325 + $0x1d0] sm:$0xff] %v442
                %v444 = vld [vmem:[%s324 + $0x388] sm:$0xff]
                %445 = vst [vmem:[%s325 + $0x1d8] sm:$0xff] %v444
                %v446 = vld [vmem:[%s324 + $0x3c0] sm:$0xff]
                %447 = vst [vmem:[%s325 + $0x1e0] sm:$0xff] %v446
                %v448 = vld [vmem:[%s324 + $0x3c8] sm:$0xff]
                %449 = vst [vmem:[%s325 + $0x1e8] sm:$0xff] %v448
                %v450 = vld [vmem:[%s324 + $0x3d0] sm:$0xff]
                %451 = vst [vmem:[%s325 + $0x1f0] sm:$0xff] %v450
                %v452 = vld [vmem:[%s324 + $0x3d8] sm:$0xff]
                %453 = vst [vmem:[%s325 + $0x1f8] sm:$0xff] %v452
                %v454 = vld [vmem:[%s324 + $0x3e0] sm:$0xff]
                %455 = vst [vmem:[%s325 + $0x200] sm:$0xff] %v454
                %v456 = vld [vmem:[%s324 + $0x3e8] sm:$0xff]
                %457 = vst [vmem:[%s325 + $0x208] sm:$0xff] %v456
                %v458 = vld [vmem:[%s324 + $0x420] sm:$0xff]
                %459 = vst [vmem:[%s325 + $0x210] sm:$0xff] %v458
                %v460 = vld [vmem:[%s324 + $0x428] sm:$0xff]
                %461 = vst [vmem:[%s325 + $0x218] sm:$0xff] %v460
                %v462 = vld [vmem:[%s324 + $0x430] sm:$0xff]
                %463 = vst [vmem:[%s325 + $0x220] sm:$0xff] %v462
                %v464 = vld [vmem:[%s324 + $0x438] sm:$0xff]
                %465 = vst [vmem:[%s325 + $0x228] sm:$0xff] %v464
                %v466 = vld [vmem:[%s324 + $0x440] sm:$0xff]
                %467 = vst [vmem:[%s325 + $0x230] sm:$0xff] %v466
                %v468 = vld [vmem:[%s324 + $0x448] sm:$0xff]
                %469 = vst [vmem:[%s325 + $0x238] sm:$0xff] %v468
                %v470 = vld [vmem:[%s324 + $0x480] sm:$0xff]
                %471 = vst [vmem:[%s325 + $0x240] sm:$0xff] %v470
                %v472 = vld [vmem:[%s324 + $0x488] sm:$0xff]
                %473 = vst [vmem:[%s325 + $0x248] sm:$0xff] %v472
                %v474 = vld [vmem:[%s324 + $0x490] sm:$0xff]
                %475 = vst [vmem:[%s325 + $0x250] sm:$0xff] %v474
                %v476 = vld [vmem:[%s324 + $0x498] sm:$0xff]
                %477 = vst [vmem:[%s325 + $0x258] sm:$0xff] %v476
                %v478 = vld [vmem:[%s324 + $0x4a0] sm:$0xff]
                %479 = vst [vmem:[%s325 + $0x260] sm:$0xff] %v478
                %v480 = vld [vmem:[%s324 + $0x4a8] sm:$0xff]
                %481 = vst [vmem:[%s325 + $0x268] sm:$0xff] %v480
                %v482 = vld [vmem:[%s324 + $0x4e0] sm:$0xff]
                %483 = vst [vmem:[%s325 + $0x270] sm:$0xff] %v482
                %v484 = vld [vmem:[%s324 + $0x4e8] sm:$0xff]
                %485 = vst [vmem:[%s325 + $0x278] sm:$0xff] %v484
                %v486 = vld [vmem:[%s324 + $0x4f0] sm:$0xff]
                %487 = vst [vmem:[%s325 + $0x280] sm:$0xff] %v486
                %v488 = vld [vmem:[%s324 + $0x4f8] sm:$0xff]
                %489 = vst [vmem:[%s325 + $0x288] sm:$0xff] %v488
                %v490 = vld [vmem:[%s324 + $0x500] sm:$0xff]
                %491 = vst [vmem:[%s325 + $0x290] sm:$0xff] %v490
                %v492 = vld [vmem:[%s324 + $0x508] sm:$0xff]
                %493 = vst [vmem:[%s325 + $0x298] sm:$0xff] %v492
                %v494 = vld [vmem:[%s324 + $0x540] sm:$0xff]
                %495 = vst [vmem:[%s325 + $0x2a0] sm:$0xff] %v494
                %v496 = vld [vmem:[%s324 + $0x548] sm:$0xff]
                %497 = vst [vmem:[%s325 + $0x2a8] sm:$0xff] %v496
                %v498 = vld [vmem:[%s324 + $0x550] sm:$0xff]
                %499 = vst [vmem:[%s325 + $0x2b0] sm:$0xff] %v498
                %v500 = vld [vmem:[%s324 + $0x558] sm:$0xff]
                %501 = vst [vmem:[%s325 + $0x2b8] sm:$0xff] %v500
                %v502 = vld [vmem:[%s324 + $0x560] sm:$0xff]
                %503 = vst [vmem:[%s325 + $0x2c0] sm:$0xff] %v502
                %v504 = vld [vmem:[%s324 + $0x568] sm:$0xff]
                %505 = vst [vmem:[%s325 + $0x2c8] sm:$0xff] %v504
                %v506 = vld [vmem:[%s324 + $0x5a0] sm:$0xff]
                %507 = vst [vmem:[%s325 + $0x2d0] sm:$0xff] %v506
                %v508 = vld [vmem:[%s324 + $0x5a8] sm:$0xff]
                %509 = vst [vmem:[%s325 + $0x2d8] sm:$0xff] %v508
                %v510 = vld [vmem:[%s324 + $0x5b0] sm:$0xff]
                %511 = vst [vmem:[%s325 + $0x2e0] sm:$0xff] %v510
                %v512 = vld [vmem:[%s324 + $0x5b8] sm:$0xff]
                %513 = vst [vmem:[%s325 + $0x2e8] sm:$0xff] %v512
                %v514 = vld [vmem:[%s324 + $0x5c0] sm:$0xff]
                %515 = vst [vmem:[%s325 + $0x2f0] sm:$0xff] %v514
                %v516 = vld [vmem:[%s324 + $0x5c8] sm:$0xff]
                %517 = vst [vmem:[%s325 + $0x2f8] sm:$0xff] %v516
              $region69: #{reward_decoder_forward.1} parent=63 // loop_footer
                %s323 = sadd.s32 1, %s319
              $region70: #{reward_decoder_forward.1} parent=63 // loop_footer_branch
                %318 = sbr.rel target = $region66
              $region71: #{reward_decoder_forward.1} parent=63 // loop_exit
                _
            $region64: #{reward_decoder_forward.1} parent=59 // pred_fallthru
              _
            // Predicated region
            $region72: #{reward_decoder_forward.1} parent=59 // pred_check
              _
            $region73: #{reward_decoder_forward.1} parent=59 // pred_check_branch
              %519 = sbr.rel target = $region75
            $region74: #{reward_decoder_forward.1} parent=59 // pred_region
              _
            $region75: #{reward_decoder_forward.1} parent=59 // pred_fallthru
              _
          $region60: #{reward_decoder_forward.1} parent=55 // pred_fallthru
            _
          %520 = vnop
        $region56: #{reward_decoder_forward.1} parent=51 // pred_fallthru
          _
      $region52: #{reward_decoder_forward.1} parent=5 // pred_fallthru
        _
      %p521 = scmp.le.s32.totalorder 1, %s17
      %p522 = scmp.lt.s32.totalorder %s17, 3
      %p523 = pnand %p521, %p522
      %p524 = pneg %p523
      // Predicated region
      $region76: #{reward_decoder_forward.1} parent=5 // pred_check
        _
      $region77: #{reward_decoder_forward.1} parent=5 // pred_check_branch
        %526 = sbr.rel (%p523) target = $region79
      $region78: #{reward_decoder_forward.1} parent=5 // pred_region
        %s527 = ssub.s32 %s17, 1
        %s528 = sand.u32 %s30, 1
        %s529 = sand.u32 %s30, 1
        %s530 = smul.addr %s529, 768
        %s531 = scalar_lea.vmem [#allocation3], %s530
        // Predicated region
        $region80: #{reward_decoder_forward.1} parent=78 // pred_check
          %p532 = pneg %p43
        $region81: #{reward_decoder_forward.1} parent=78 // pred_check_branch
          %534 = sbr.rel (%p532) target = $region83
        $region82: #{reward_decoder_forward.1} parent=78 // pred_region
          _
        $region83: #{reward_decoder_forward.1} parent=78 // pred_fallthru
          _
        %s535 = sand.u32 %s30, 1
        %s536 = sand.u32 %s30, 1
        %s537 = smul.addr %s536, 768
        %s538 = scalar_lea.vmem [#allocation3], %s537
        %p539 = pneg %p43
        %p540 = pneg %p40
        %p541 = pneg %p64
        %p542 = pneg %p61
        %p543 = pneg %p85
        %p544 = pneg %p82
        %p545 = pneg %p106
        %p546 = pneg %p103
        %p547 = pneg %p127
        %p548 = pneg %p124
        %p549 = pneg %p148
        %p550 = pneg %p145
        %p551 = pneg %p169
        %p552 = pneg %p166
        %p553 = pneg %p190
        %p554 = pneg %p187
        %p555 = pneg %p211
        %p556 = pneg %p208
        %p557 = pneg %p232
        %p558 = pneg %p229
        %p559 = pneg %p258
        %p560 = pneg %p255
        %s561 = smul.u32 6, %s22
        %p562 = scmp.lt.s32.totalorder %s561, 11
        %s563 = scalar_select %p562, %s561, 11
        %s564 = scalar_lea.vmem %s10, %s563
        %s565 = smul.u32 6, %s22
        %s566 = smul.u32 6, %s22
        %p567 = scmp.lt.s32.totalorder %s566, 11
        %s568 = scalar_select %p567, %s566, 11
        %s569 = scalar_lea.vmem %s10, %s568
        %s570 = smul.u32 6, %s22
        %v571 = vld [vmem:[%s531] sm:$0xff]
        %v572 = vld [vmem:[%s531 + $0x8] sm:$0xff]
        %v573 = vld [vmem:[%s531 + $0x10] sm:$0xff]
        %v574 = vld [vmem:[%s531 + $0x18] sm:$0xff]
        %v575 = vld [vmem:[%s531 + $0x20] sm:$0xff]
        %v576 = vld [vmem:[%s531 + $0x28] sm:$0xff]
        %v577 = vld [vmem:[%s531 + $0x30] sm:$0xff]
        %v578 = vld [vmem:[%s531 + $0x38] sm:$0xff]
        %v579 = vld [vmem:[%s531 + $0x40] sm:$0xff]
        %v580 = vld [vmem:[%s531 + $0x48] sm:$0xff]
        %v581 = vld [vmem:[%s531 + $0x50] sm:$0xff]
        %v582 = vld [vmem:[%s531 + $0x58] sm:$0xff]
        %v583 = vld [vmem:[%s531 + $0x60] sm:$0xff]
        %v584 = vld [vmem:[%s531 + $0x68] sm:$0xff]
        %v585 = vld [vmem:[%s531 + $0x70] sm:$0xff]
        %v586 = vld [vmem:[%s531 + $0x78] sm:$0xff]
        %v587 = vld [vmem:[%s531 + $0x80] sm:$0xff]
        %v588 = vld [vmem:[%s531 + $0x88] sm:$0xff]
        %v589 = vld [vmem:[%s531 + $0x90] sm:$0xff]
        %v590 = vld [vmem:[%s531 + $0x98] sm:$0xff]
        %v591 = vld [vmem:[%s531 + $0xa0] sm:$0xff]
        %v592 = vld [vmem:[%s531 + $0xa8] sm:$0xff]
        %v593 = vld [vmem:[%s531 + $0xb0] sm:$0xff]
        %v594 = vld [vmem:[%s531 + $0xb8] sm:$0xff]
        %v595 = vld [vmem:[%s531 + $0xc0] sm:$0xff]
        %v596 = vld [vmem:[%s531 + $0xc8] sm:$0xff]
        %v597 = vld [vmem:[%s531 + $0xd0] sm:$0xff]
        %v598 = vld [vmem:[%s531 + $0xd8] sm:$0xff]
        %v599 = vld [vmem:[%s531 + $0xe0] sm:$0xff]
        %v600 = vld [vmem:[%s531 + $0xe8] sm:$0xff]
        %v601 = vld [vmem:[%s531 + $0xf0] sm:$0xff]
        %v602 = vld [vmem:[%s531 + $0xf8] sm:$0xff]
        %v603 = vld [vmem:[%s531 + $0x100] sm:$0xff]
        %v604 = vld [vmem:[%s531 + $0x108] sm:$0xff]
        %v605 = vld [vmem:[%s531 + $0x110] sm:$0xff]
        %v606 = vld [vmem:[%s531 + $0x118] sm:$0xff]
        %v607 = vld [vmem:[%s531 + $0x120] sm:$0xff]
        %v608 = vld [vmem:[%s531 + $0x128] sm:$0xff]
        %v609 = vld [vmem:[%s531 + $0x130] sm:$0xff]
        %v610 = vld [vmem:[%s531 + $0x138] sm:$0xff]
        %v611 = vld [vmem:[%s531 + $0x140] sm:$0xff]
        %v612 = vld [vmem:[%s531 + $0x148] sm:$0xff]
        %v613 = vld [vmem:[%s531 + $0x150] sm:$0xff]
        %v614 = vld [vmem:[%s531 + $0x158] sm:$0xff]
        %v615 = vld [vmem:[%s531 + $0x160] sm:$0xff]
        %v616 = vld [vmem:[%s531 + $0x168] sm:$0xff]
        %v617 = vld [vmem:[%s531 + $0x170] sm:$0xff]
        %v618 = vld [vmem:[%s531 + $0x178] sm:$0xff]
        %v619 = vld [vmem:[%s531 + $0x180] sm:$0xff]
        %v620 = vld [vmem:[%s531 + $0x188] sm:$0xff]
        %v621 = vld [vmem:[%s531 + $0x190] sm:$0xff]
        %v622 = vld [vmem:[%s531 + $0x198] sm:$0xff]
        %v623 = vld [vmem:[%s531 + $0x1a0] sm:$0xff]
        %v624 = vld [vmem:[%s531 + $0x1a8] sm:$0xff]
        %v625 = vld [vmem:[%s531 + $0x1b0] sm:$0xff]
        %v626 = vld [vmem:[%s531 + $0x1b8] sm:$0xff]
        %v627 = vld [vmem:[%s531 + $0x1c0] sm:$0xff]
        %v628 = vld [vmem:[%s531 + $0x1c8] sm:$0xff]
        %v629 = vld [vmem:[%s531 + $0x1d0] sm:$0xff]
        %v630 = vld [vmem:[%s531 + $0x1d8] sm:$0xff]
        %v631 = vld [vmem:[%s531 + $0x1e0] sm:$0xff]
        %v632 = vld [vmem:[%s531 + $0x1e8] sm:$0xff]
        %v633 = vld [vmem:[%s531 + $0x1f0] sm:$0xff]
        %v634 = vld [vmem:[%s531 + $0x1f8] sm:$0xff]
        %v635 = vld [vmem:[%s531 + $0x200] sm:$0xff]
        %v636 = vld [vmem:[%s531 + $0x208] sm:$0xff]
        %v637 = vld [vmem:[%s531 + $0x210] sm:$0xff]
        %v638 = vld [vmem:[%s531 + $0x218] sm:$0xff]
        %v639 = vld [vmem:[%s531 + $0x220] sm:$0xff]
        %v640 = vld [vmem:[%s531 + $0x228] sm:$0xff]
        %v641 = vld [vmem:[%s531 + $0x230] sm:$0xff]
        %v642 = vld [vmem:[%s531 + $0x238] sm:$0xff]
        %v643 = vld [vmem:[%s531 + $0x240] sm:$0xff]
        %v644 = vld [vmem:[%s531 + $0x248] sm:$0xff]
        %v645 = vld [vmem:[%s531 + $0x250] sm:$0xff]
        %v646 = vld [vmem:[%s531 + $0x258] sm:$0xff]
        %v647 = vld [vmem:[%s531 + $0x260] sm:$0xff]
        %v648 = vld [vmem:[%s531 + $0x268] sm:$0xff]
        %v649 = vld [vmem:[%s531 + $0x270] sm:$0xff]
        %v650 = vld [vmem:[%s531 + $0x278] sm:$0xff]
        %v651 = vld [vmem:[%s531 + $0x280] sm:$0xff]
        %v652 = vld [vmem:[%s531 + $0x288] sm:$0xff]
        %v653 = vld [vmem:[%s531 + $0x290] sm:$0xff]
        %v654 = vld [vmem:[%s531 + $0x298] sm:$0xff]
        %v655 = vld [vmem:[%s531 + $0x2a0] sm:$0xff]
        %v656 = vld [vmem:[%s531 + $0x2a8] sm:$0xff]
        %v657 = vld [vmem:[%s531 + $0x2b0] sm:$0xff]
        %v658 = vld [vmem:[%s531 + $0x2b8] sm:$0xff]
        %v659 = vld [vmem:[%s531 + $0x2c0] sm:$0xff]
        %v660 = vld [vmem:[%s531 + $0x2c8] sm:$0xff]
        %v661 = vld [vmem:[%s531 + $0x2d0] sm:$0xff]
        %v662 = vld [vmem:[%s531 + $0x2d8] sm:$0xff]
        %v663 = vld [vmem:[%s531 + $0x2e0] sm:$0xff]
        %v664 = vld [vmem:[%s531 + $0x2e8] sm:$0xff]
        %v665 = vld [vmem:[%s531 + $0x2f0] sm:$0xff]
        %v666 = vld [vmem:[%s531 + $0x2f8] sm:$0xff]
        %v667 = vld [vmem:[%s1] sm:$0xff]
        %v668 = vld [vmem:[%s1 + $0x8] sm:$0xff]
        %v669 = vld [vmem:[%s1 + $0x10] sm:$0xff]
        %v670 = vld [vmem:[%s1 + $0x18] sm:$0xff]
        %v671 = vld [vmem:[%s1 + $0x20] sm:$0xff]
        %v672 = vld [vmem:[%s1 + $0x28] sm:$0xff]
        %v673 = vld [vmem:[%s1 + $0x30] sm:$0xff]
        %v674 = vld [vmem:[%s1 + $0x38] sm:$0xff]
        %v675 = vld [vmem:[%s1 + $0x40] sm:$0xff]
        %v676 = vld [vmem:[%s1 + $0x48] sm:$0xff]
        %v677 = vld [vmem:[%s1 + $0x50] sm:$0xff]
        %v678 = vld [vmem:[%s1 + $0x58] sm:$0xff]
        %v679 = vld [vmem:[%s1 + $0x60] sm:$0xff]
        %v680 = vld [vmem:[%s1 + $0x68] sm:$0xff]
        %v681 = vld [vmem:[%s1 + $0x70] sm:$0xff]
        %v682 = vld [vmem:[%s1 + $0x78] sm:$0xff]
        %v683 = vld [vmem:[%s2] sm:$0xff]
        %v684 = vld [vmem:[%s2 + $0x8] sm:$0xff]
        %v685 = vld [vmem:[%s2 + $0x10] sm:$0xff]
        %v686 = vld [vmem:[%s2 + $0x18] sm:$0xff]
        %v687 = vld [vmem:[%s2 + $0x20] sm:$0xff]
        %v688 = vld [vmem:[%s2 + $0x28] sm:$0xff]
        %v689 = vld [vmem:[%s2 + $0x30] sm:$0xff]
        %v690 = vld [vmem:[%s2 + $0x38] sm:$0xff]
        %v691 = vld [vmem:[%s2 + $0x40] sm:$0xff]
        %v692 = vld [vmem:[%s2 + $0x48] sm:$0xff]
        %v693 = vld [vmem:[%s2 + $0x50] sm:$0xff]
        %v694 = vld [vmem:[%s2 + $0x58] sm:$0xff]
        %v695 = vld [vmem:[%s2 + $0x60] sm:$0xff]
        %v696 = vld [vmem:[%s2 + $0x68] sm:$0xff]
        %v697 = vld [vmem:[%s2 + $0x70] sm:$0xff]
        %v698 = vld [vmem:[%s2 + $0x78] sm:$0xff]
        %700 = vset.pattern.permute.xlu0 0
        %701 = vperm.xlu0 %700, %v683
        %v702 = vpop.permute.xlu0 %701
        %705 = vset.pattern.permute.xlu0 0
        %706 = vperm.xlu0 %705, %v684
        %v707 = vpop.permute.xlu0 %706
        %710 = vset.pattern.permute.xlu0 0
        %711 = vperm.xlu0 %710, %v685
        %v712 = vpop.permute.xlu0 %711
        %715 = vset.pattern.permute.xlu0 0
        %716 = vperm.xlu0 %715, %v686
        %v717 = vpop.permute.xlu0 %716
        %720 = vset.pattern.permute.xlu0 0
        %721 = vperm.xlu0 %720, %v687
        %v722 = vpop.permute.xlu0 %721
        %725 = vset.pattern.permute.xlu0 0
        %726 = vperm.xlu0 %725, %v688
        %v727 = vpop.permute.xlu0 %726
        %730 = vset.pattern.permute.xlu0 0
        %731 = vperm.xlu0 %730, %v689
        %v732 = vpop.permute.xlu0 %731
        %735 = vset.pattern.permute.xlu0 0
        %736 = vperm.xlu0 %735, %v690
        %v737 = vpop.permute.xlu0 %736
        %740 = vset.pattern.permute.xlu0 0
        %741 = vperm.xlu0 %740, %v691
        %v742 = vpop.permute.xlu0 %741
        %745 = vset.pattern.permute.xlu0 0
        %746 = vperm.xlu0 %745, %v692
        %v747 = vpop.permute.xlu0 %746
        %750 = vset.pattern.permute.xlu0 0
        %751 = vperm.xlu0 %750, %v693
        %v752 = vpop.permute.xlu0 %751
        %755 = vset.pattern.permute.xlu0 0
        %756 = vperm.xlu0 %755, %v694
        %v757 = vpop.permute.xlu0 %756
        %760 = vset.pattern.permute.xlu0 0
        %761 = vperm.xlu0 %760, %v695
        %v762 = vpop.permute.xlu0 %761
        %765 = vset.pattern.permute.xlu0 0
        %766 = vperm.xlu0 %765, %v696
        %v767 = vpop.permute.xlu0 %766
        %770 = vset.pattern.permute.xlu0 0
        %771 = vperm.xlu0 %770, %v697
        %v772 = vpop.permute.xlu0 %771
        %775 = vset.pattern.permute.xlu0 0
        %776 = vperm.xlu0 %775, %v698
        %v777 = vpop.permute.xlu0 %776
        %779 = vmatprep.subr.mxu0 %v572
        %780 = vmatpush1.msra.mxu0 %v571
        %781 = vmatprep.subr.mxu0 %v578
        %782 = vmatpush1.msra.mxu0 %v577
        %783 = vmatprep.subr.mxu0 %v584
        %784 = vmatpush1.msra.mxu0 %v583
        %785 = vmatprep.subr.mxu0 %v590
        %786 = vmatpush1.msra.mxu0 %v589
        %787 = vmatprep.subr.mxu0 %v596
        %788 = vmatpush1.msra.mxu0 %v595
        %789 = vmatprep.subr.mxu0 %v602
        %790 = vmatpush1.msra.mxu0 %v601
        %791 = vmatprep.subr.mxu0 %v608
        %792 = vmatpush1.msra.mxu0 %v607
        %793 = vmatprep.subr.mxu0 %v614
        %794 = vmatpush1.msra.mxu0 %v613
        %795 = vmatprep.subr.mxu0 %v620
        %796 = vmatpush1.msra.mxu0 %v619
        %797 = vmatprep.subr.mxu0 %v626
        %798 = vmatpush1.msra.mxu0 %v625
        %799 = vmatprep.subr.mxu0 %v632
        %800 = vmatpush1.msra.mxu0 %v631
        %801 = vmatprep.subr.mxu0 %v638
        %802 = vmatpush1.msra.mxu0 %v637
        %803 = vmatprep.subr.mxu0 %v644
        %804 = vmatpush1.msra.mxu0 %v643
        %805 = vmatprep.subr.mxu0 %v650
        %806 = vmatpush1.msra.mxu0 %v649
        %807 = vmatprep.subr.mxu0 %v656
        %808 = vmatpush1.msra.mxu0 %v655
        %809 = vmatprep.subr.mxu0 %v662
        %810 = vmatpush1.msra.mxu0 %v661
        %811 = vmatprep.subr.mxu0 0.0
        %812 = vmatpush1.msra.mxu0 0.0
        %813 = vmatprep.subr.mxu0 0.0
        %814 = vmatpush1.msra.mxu0 0.0
        %815 = vmatprep.subr.mxu0 0.0
        %816 = vmatpush1.msra.mxu0 0.0
        %817 = vmatprep.subr.mxu0 0.0
        %818 = vmatpush1.msra.mxu0 0.0
        %819 = vmatprep.subr.mxu0 0.0
        %820 = vmatpush1.msra.mxu0 0.0
        %821 = vmatprep.subr.mxu0 0.0
        %822 = vmatpush1.msra.mxu0 0.0
        %823 = vmatprep.subr.mxu0 0.0
        %824 = vmatpush1.msra.mxu0 0.0
        %825 = vmatprep.subr.mxu0 0.0
        %826 = vmatpush1.msra.mxu0 0.0
        %827 = vmatprep.subr.mxu0 0.0
        %828 = vmatpush1.msra.mxu0 0.0
        %829 = vmatprep.subr.mxu0 0.0
        %830 = vmatpush1.msra.mxu0 0.0
        %831 = vmatprep.subr.mxu0 0.0
        %832 = vmatpush1.msra.mxu0 0.0
        %833 = vmatprep.subr.mxu0 0.0
        %834 = vmatpush1.msra.mxu0 0.0
        %835 = vmatprep.subr.mxu0 0.0
        %836 = vmatpush1.msra.mxu0 0.0
        %837 = vmatprep.subr.mxu0 0.0
        %838 = vmatpush1.msra.mxu0 0.0
        %839 = vmatprep.subr.mxu0 0.0
        %840 = vmatpush1.msra.mxu0 0.0
        %841 = vmatprep.subr.mxu0 0.0
        %842 = vmatpush1.msra.mxu0 0.0
        %843 = vmatprep.mubr.f32.mxu0 0.0
        %844 = vmatmul.mubr.f32.gmra.mrb[0].mxu0 %v667
        %v845 = vpop.f32.mrb[0].mxu0
        %v846 = vadd.f32 %v702, %v845
        %v847 = vpop.f32.mrb[0].mxu0
        %v848 = vadd.f32 %v702, %v847
        %849 = vmatprep.mubr.f32.mxu0 0.0
        %850 = vmatmul.mubr.f32.gmra.mrb[0].mxu0 %v668
        %v851 = vpop.f32.mrb[0].mxu0
        %v852 = vadd.f32 %v707, %v851
        %v853 = vpop.f32.mrb[0].mxu0
        %v854 = vadd.f32 %v707, %v853
        %855 = vmatprep.mubr.f32.mxu0 0.0
        %856 = vmatmul.mubr.f32.gmra.mrb[0].mxu0 %v669
        %v857 = vpop.f32.mrb[0].mxu0
        %v858 = vadd.f32 %v712, %v857
        %v859 = vpop.f32.mrb[0].mxu0
        %v860 = vadd.f32 %v712, %v859
        %861 = vmatprep.mubr.f32.mxu0 0.0
        %862 = vmatmul.mubr.f32.gmra.mrb[0].mxu0 %v670
        %v863 = vpop.f32.mrb[0].mxu0
        %v864 = vadd.f32 %v717, %v863
        %v865 = vpop.f32.mrb[0].mxu0
        %v866 = vadd.f32 %v717, %v865
        %867 = vmatprep.mubr.f32.mxu0 0.0
        %868 = vmatmul.mubr.f32.gmra.mrb[0].mxu0 %v671
        %v869 = vpop.f32.mrb[0].mxu0
        %v870 = vadd.f32 %v722, %v869
        %v871 = vpop.f32.mrb[0].mxu0
        %v872 = vadd.f32 %v722, %v871
        %873 = vmatprep.mubr.f32.mxu0 0.0
        %874 = vmatmul.mubr.f32.gmra.mrb[0].mxu0 %v672
        %v875 = vpop.f32.mrb[0].mxu0
        %v876 = vadd.f32 %v727, %v875
        %v877 = vpop.f32.mrb[0].mxu0
        %v878 = vadd.f32 %v727, %v877
        %879 = vmatprep.mubr.f32.mxu0 0.0
        %880 = vmatmul.mubr.f32.gmra.mrb[0].mxu0 %v673
        %v881 = vpop.f32.mrb[0].mxu0
        %v882 = vadd.f32 %v732, %v881
        %v883 = vpop.f32.mrb[0].mxu0
        %v884 = vadd.f32 %v732, %v883
        %885 = vmatprep.mubr.f32.mxu0 0.0
        %886 = vmatmul.mubr.f32.gmra.mrb[0].mxu0 %v674
        %v887 = vpop.f32.mrb[0].mxu0
        %v888 = vadd.f32 %v737, %v887
        %v889 = vpop.f32.mrb[0].mxu0
        %v890 = vadd.f32 %v737, %v889
        %891 = vmatprep.mubr.f32.mxu0 0.0
        %892 = vmatmul.mubr.f32.gmra.mrb[0].mxu0 %v675
        %v893 = vpop.f32.mrb[0].mxu0
        %v894 = vadd.f32 %v742, %v893
        %v895 = vpop.f32.mrb[0].mxu0
        %v896 = vadd.f32 %v742, %v895
        %897 = vmatprep.mubr.f32.mxu0 0.0
        %898 = vmatmul.mubr.f32.gmra.mrb[0].mxu0 %v676
        %v899 = vpop.f32.mrb[0].mxu0
        %v900 = vadd.f32 %v747, %v899
        %v901 = vpop.f32.mrb[0].mxu0
        %v902 = vadd.f32 %v747, %v901
        %903 = vmatprep.mubr.f32.mxu0 0.0
        %904 = vmatmul.mubr.f32.gmra.mrb[0].mxu0 %v677
        %v905 = vpop.f32.mrb[0].mxu0
        %v906 = vadd.f32 %v752, %v905
        %v907 = vpop.f32.mrb[0].mxu0
        %v908 = vadd.f32 %v752, %v907
        %909 = vmatprep.mubr.f32.mxu0 0.0
        %910 = vmatmul.mubr.f32.gmra.mrb[0].mxu0 %v678
        %v911 = vpop.f32.mrb[0].mxu0
        %v912 = vadd.f32 %v757, %v911
        %v913 = vpop.f32.mrb[0].mxu0
        %v914 = vadd.f32 %v757, %v913
        %915 = vmatprep.mubr.f32.mxu0 0.0
        %916 = vmatmul.mubr.f32.gmra.mrb[0].mxu0 %v679
        %v917 = vpop.f32.mrb[0].mxu0
        %v918 = vadd.f32 %v762, %v917
        %v919 = vpop.f32.mrb[0].mxu0
        %v920 = vadd.f32 %v762, %v919
        %921 = vmatprep.mubr.f32.mxu0 0.0
        %922 = vmatmul.mubr.f32.gmra.mrb[0].mxu0 %v680
        %v923 = vpop.f32.mrb[0].mxu0
        %v924 = vadd.f32 %v767, %v923
        %v925 = vpop.f32.mrb[0].mxu0
        %v926 = vadd.f32 %v767, %v925
        %927 = vmatprep.mubr.f32.mxu0 0.0
        %928 = vmatmul.mubr.f32.gmra.mrb[0].mxu0 %v681
        %v929 = vpop.f32.mrb[0].mxu0
        %v930 = vadd.f32 %v772, %v929
        %v931 = vpop.f32.mrb[0].mxu0
        %v932 = vadd.f32 %v772, %v931
        %933 = vmatprep.mubr.f32.mxu0 0.0
        %934 = vmatmul.mubr.f32.gmra.mrb[0].mxu0 %v682
        %v935 = vpop.f32.mrb[0].mxu0
        %v936 = vadd.f32 %v777, %v935
        %v937 = vpop.f32.mrb[0].mxu0
        %v938 = vadd.f32 %v777, %v937
        %939 = vdwg.mxu0
        %940 = vmatprep.subr.mxu0 %v574
        %941 = vmatpush1.msra.mxu0 %v573
        %942 = vmatprep.subr.mxu0 %v580
        %943 = vmatpush1.msra.mxu0 %v579
        %944 = vmatprep.subr.mxu0 %v586
        %945 = vmatpush1.msra.mxu0 %v585
        %946 = vmatprep.subr.mxu0 %v592
        %947 = vmatpush1.msra.mxu0 %v591
        %948 = vmatprep.subr.mxu0 %v598
        %949 = vmatpush1.msra.mxu0 %v597
        %950 = vmatprep.subr.mxu0 %v604
        %951 = vmatpush1.msra.mxu0 %v603
        %952 = vmatprep.subr.mxu0 %v610
        %953 = vmatpush1.msra.mxu0 %v609
        %954 = vmatprep.subr.mxu0 %v616
        %955 = vmatpush1.msra.mxu0 %v615
        %956 = vmatprep.subr.mxu0 %v622
        %957 = vmatpush1.msra.mxu0 %v621
        %958 = vmatprep.subr.mxu0 %v628
        %959 = vmatpush1.msra.mxu0 %v627
        %960 = vmatprep.subr.mxu0 %v634
        %961 = vmatpush1.msra.mxu0 %v633
        %962 = vmatprep.subr.mxu0 %v640
        %963 = vmatpush1.msra.mxu0 %v639
        %964 = vmatprep.subr.mxu0 %v646
        %965 = vmatpush1.msra.mxu0 %v645
        %966 = vmatprep.subr.mxu0 %v652
        %967 = vmatpush1.msra.mxu0 %v651
        %968 = vmatprep.subr.mxu0 %v658
        %969 = vmatpush1.msra.mxu0 %v657
        %970 = vmatprep.subr.mxu0 %v664
        %971 = vmatpush1.msra.mxu0 %v663
        %972 = vmatprep.subr.mxu0 0.0
        %973 = vmatpush1.msra.mxu0 0.0
        %974 = vmatprep.subr.mxu0 0.0
        %975 = vmatpush1.msra.mxu0 0.0
        %976 = vmatprep.subr.mxu0 0.0
        %977 = vmatpush1.msra.mxu0 0.0
        %978 = vmatprep.subr.mxu0 0.0
        %979 = vmatpush1.msra.mxu0 0.0
        %980 = vmatprep.subr.mxu0 0.0
        %981 = vmatpush1.msra.mxu0 0.0
        %982 = vmatprep.subr.mxu0 0.0
        %983 = vmatpush1.msra.mxu0 0.0
        %984 = vmatprep.subr.mxu0 0.0
        %985 = vmatpush1.msra.mxu0 0.0
        %986 = vmatprep.subr.mxu0 0.0
        %987 = vmatpush1.msra.mxu0 0.0
        %988 = vmatprep.subr.mxu0 0.0
        %989 = vmatpush1.msra.mxu0 0.0
        %990 = vmatprep.subr.mxu0 0.0
        %991 = vmatpush1.msra.mxu0 0.0
        %992 = vmatprep.subr.mxu0 0.0
        %993 = vmatpush1.msra.mxu0 0.0
        %994 = vmatprep.subr.mxu0 0.0
        %995 = vmatpush1.msra.mxu0 0.0
        %996 = vmatprep.subr.mxu0 0.0
        %997 = vmatpush1.msra.mxu0 0.0
        %998 = vmatprep.subr.mxu0 0.0
        %999 = vmatpush1.msra.mxu0 0.0
        %1000 = vmatprep.subr.mxu0 0.0
        %1001 = vmatpush1.msra.mxu0 0.0
        %1002 = vmatprep.subr.mxu0 0.0
        %1003 = vmatpush1.msra.mxu0 0.0
        %1004 = vmatprep.mubr.f32.mxu0 0.0
        %1005 = vmatmul.mubr.f32.gmra.mrb[0].mxu0 %v667
        %v1006 = vpop.f32.mrb[0].mxu0
        %v1007 = vadd.f32 %v702, %v1006
        %v1008 = vpop.f32.mrb[0].mxu0
        %v1009 = vadd.f32 %v702, %v1008
        %1010 = vmatprep.mubr.f32.mxu0 0.0
        %1011 = vmatmul.mubr.f32.gmra.mrb[0].mxu0 %v668
        %v1012 = vpop.f32.mrb[0].mxu0
        %v1013 = vadd.f32 %v707, %v1012
        %v1014 = vpop.f32.mrb[0].mxu0
        %v1015 = vadd.f32 %v707, %v1014
        %1016 = vmatprep.mubr.f32.mxu0 0.0
        %1017 = vmatmul.mubr.f32.gmra.mrb[0].mxu0 %v669
        %v1018 = vpop.f32.mrb[0].mxu0
        %v1019 = vadd.f32 %v712, %v1018
        %v1020 = vpop.f32.mrb[0].mxu0
        %v1021 = vadd.f32 %v712, %v1020
        %1022 = vmatprep.mubr.f32.mxu0 0.0
        %1023 = vmatmul.mubr.f32.gmra.mrb[0].mxu0 %v670
        %v1024 = vpop.f32.mrb[0].mxu0
        %v1025 = vadd.f32 %v717, %v1024
        %v1026 = vpop.f32.mrb[0].mxu0
        %v1027 = vadd.f32 %v717, %v1026
        %1028 = vmatprep.mubr.f32.mxu0 0.0
        %1029 = vmatmul.mubr.f32.gmra.mrb[0].mxu0 %v671
        %v1030 = vpop.f32.mrb[0].mxu0
        %v1031 = vadd.f32 %v722, %v1030
        %v1032 = vpop.f32.mrb[0].mxu0
        %v1033 = vadd.f32 %v722, %v1032
        %1034 = vmatprep.mubr.f32.mxu0 0.0
        %1035 = vmatmul.mubr.f32.gmra.mrb[0].mxu0 %v672
        %v1036 = vpop.f32.mrb[0].mxu0
        %v1037 = vadd.f32 %v727, %v1036
        %v1038 = vpop.f32.mrb[0].mxu0
        %v1039 = vadd.f32 %v727, %v1038
        %1040 = vmatprep.mubr.f32.mxu0 0.0
        %1041 = vmatmul.mubr.f32.gmra.mrb[0].mxu0 %v673
        %v1042 = vpop.f32.mrb[0].mxu0
        %v1043 = vadd.f32 %v732, %v1042
        %v1044 = vpop.f32.mrb[0].mxu0
        %v1045 = vadd.f32 %v732, %v1044
        %1046 = vmatprep.mubr.f32.mxu0 0.0
        %1047 = vmatmul.mubr.f32.gmra.mrb[0].mxu0 %v674
        %v1048 = vpop.f32.mrb[0].mxu0
        %v1049 = vadd.f32 %v737, %v1048
        %v1050 = vpop.f32.mrb[0].mxu0
        %v1051 = vadd.f32 %v737, %v1050
        %1052 = vmatprep.mubr.f32.mxu0 0.0
        %1053 = vmatmul.mubr.f32.gmra.mrb[0].mxu0 %v675
        %v1054 = vpop.f32.mrb[0].mxu0
        %v1055 = vadd.f32 %v742, %v1054
        %v1056 = vpop.f32.mrb[0].mxu0
        %v1057 = vadd.f32 %v742, %v1056
        %1058 = vmatprep.mubr.f32.mxu0 0.0
        %1059 = vmatmul.mubr.f32.gmra.mrb[0].mxu0 %v676
        %v1060 = vpop.f32.mrb[0].mxu0
        %v1061 = vadd.f32 %v747, %v1060
        %v1062 = vpop.f32.mrb[0].mxu0
        %v1063 = vadd.f32 %v747, %v1062
        %1064 = vmatprep.mubr.f32.mxu0 0.0
        %1065 = vmatmul.mubr.f32.gmra.mrb[0].mxu0 %v677
        %v1066 = vpop.f32.mrb[0].mxu0
        %v1067 = vadd.f32 %v752, %v1066
        %v1068 = vpop.f32.mrb[0].mxu0
        %v1069 = vadd.f32 %v752, %v1068
        %1070 = vmatprep.mubr.f32.mxu0 0.0
        %1071 = vmatmul.mubr.f32.gmra.mrb[0].mxu0 %v678
        %v1072 = vpop.f32.mrb[0].mxu0
        %v1073 = vadd.f32 %v757, %v1072
        %v1074 = vpop.f32.mrb[0].mxu0
        %v1075 = vadd.f32 %v757, %v1074
        %1076 = vmatprep.mubr.f32.mxu0 0.0
        %1077 = vmatmul.mubr.f32.gmra.mrb[0].mxu0 %v679
        %v1078 = vpop.f32.mrb[0].mxu0
        %v1079 = vadd.f32 %v762, %v1078
        %v1080 = vpop.f32.mrb[0].mxu0
        %v1081 = vadd.f32 %v762, %v1080
        %1082 = vmatprep.mubr.f32.mxu0 0.0
        %1083 = vmatmul.mubr.f32.gmra.mrb[0].mxu0 %v680
        %v1084 = vpop.f32.mrb[0].mxu0
        %v1085 = vadd.f32 %v767, %v1084
        %v1086 = vpop.f32.mrb[0].mxu0
        %v1087 = vadd.f32 %v767, %v1086
        %1088 = vmatprep.mubr.f32.mxu0 0.0
        %1089 = vmatmul.mubr.f32.gmra.mrb[0].mxu0 %v681
        %v1090 = vpop.f32.mrb[0].mxu0
        %v1091 = vadd.f32 %v772, %v1090
        %v1092 = vpop.f32.mrb[0].mxu0
        %v1093 = vadd.f32 %v772, %v1092
        %1094 = vmatprep.mubr.f32.mxu0 0.0
        %1095 = vmatmul.mubr.f32.gmra.mrb[0].mxu0 %v682
        %v1096 = vpop.f32.mrb[0].mxu0
        %v1097 = vadd.f32 %v777, %v1096
        %v1098 = vpop.f32.mrb[0].mxu0
        %v1099 = vadd.f32 %v777, %v1098
        %1100 = vdwg.mxu0
        %1101 = vmatprep.subr.mxu0 %v576
        %1102 = vmatpush1.msra.mxu0 %v575
        %1103 = vmatprep.subr.mxu0 %v582
        %1104 = vmatpush1.msra.mxu0 %v581
        %1105 = vmatprep.subr.mxu0 %v588
        %1106 = vmatpush1.msra.mxu0 %v587
        %1107 = vmatprep.subr.mxu0 %v594
        %1108 = vmatpush1.msra.mxu0 %v593
        %1109 = vmatprep.subr.mxu0 %v600
        %1110 = vmatpush1.msra.mxu0 %v599
        %1111 = vmatprep.subr.mxu0 %v606
        %1112 = vmatpush1.msra.mxu0 %v605
        %1113 = vmatprep.subr.mxu0 %v612
        %1114 = vmatpush1.msra.mxu0 %v611
        %1115 = vmatprep.subr.mxu0 %v618
        %1116 = vmatpush1.msra.mxu0 %v617
        %1117 = vmatprep.subr.mxu0 %v624
        %1118 = vmatpush1.msra.mxu0 %v623
        %1119 = vmatprep.subr.mxu0 %v630
        %1120 = vmatpush1.msra.mxu0 %v629
        %1121 = vmatprep.subr.mxu0 %v636
        %1122 = vmatpush1.msra.mxu0 %v635
        %1123 = vmatprep.subr.mxu0 %v642
        %1124 = vmatpush1.msra.mxu0 %v641
        %1125 = vmatprep.subr.mxu0 %v648
        %1126 = vmatpush1.msra.mxu0 %v647
        %1127 = vmatprep.subr.mxu0 %v654
        %1128 = vmatpush1.msra.mxu0 %v653
        %1129 = vmatprep.subr.mxu0 %v660
        %1130 = vmatpush1.msra.mxu0 %v659
        %1131 = vmatprep.subr.mxu0 %v666
        %1132 = vmatpush1.msra.mxu0 %v665
        %1133 = vmatprep.subr.mxu0 0.0
        %1134 = vmatpush1.msra.mxu0 0.0
        %1135 = vmatprep.subr.mxu0 0.0
        %1136 = vmatpush1.msra.mxu0 0.0
        %1137 = vmatprep.subr.mxu0 0.0
        %1138 = vmatpush1.msra.mxu0 0.0
        %1139 = vmatprep.subr.mxu0 0.0
        %1140 = vmatpush1.msra.mxu0 0.0
        %1141 = vmatprep.subr.mxu0 0.0
        %1142 = vmatpush1.msra.mxu0 0.0
        %1143 = vmatprep.subr.mxu0 0.0
        %1144 = vmatpush1.msra.mxu0 0.0
        %1145 = vmatprep.subr.mxu0 0.0
        %1146 = vmatpush1.msra.mxu0 0.0
        %1147 = vmatprep.subr.mxu0 0.0
        %1148 = vmatpush1.msra.mxu0 0.0
        %1149 = vmatprep.subr.mxu0 0.0
        %1150 = vmatpush1.msra.mxu0 0.0
        %1151 = vmatprep.subr.mxu0 0.0
        %1152 = vmatpush1.msra.mxu0 0.0
        %1153 = vmatprep.subr.mxu0 0.0
        %1154 = vmatpush1.msra.mxu0 0.0
        %1155 = vmatprep.subr.mxu0 0.0
        %1156 = vmatpush1.msra.mxu0 0.0
        %1157 = vmatprep.subr.mxu0 0.0
        %1158 = vmatpush1.msra.mxu0 0.0
        %1159 = vmatprep.subr.mxu0 0.0
        %1160 = vmatpush1.msra.mxu0 0.0
        %1161 = vmatprep.subr.mxu0 0.0
        %1162 = vmatpush1.msra.mxu0 0.0
        %1163 = vmatprep.subr.mxu0 0.0
        %1164 = vmatpush1.msra.mxu0 0.0
        %1165 = vmatprep.mubr.f32.mxu0 0.0
        %1166 = vmatmul.mubr.f32.gmra.mrb[0].mxu0 %v667
        %v1167 = vpop.f32.mrb[0].mxu0
        %v1168 = vadd.f32 %v702, %v1167
        %v1169 = vpop.f32.mrb[0].mxu0
        %v1170 = vadd.f32 %v702, %v1169
        %1171 = vmatprep.mubr.f32.mxu0 0.0
        %1172 = vmatmul.mubr.f32.gmra.mrb[0].mxu0 %v668
        %v1173 = vpop.f32.mrb[0].mxu0
        %v1174 = vadd.f32 %v707, %v1173
        %v1175 = vpop.f32.mrb[0].mxu0
        %v1176 = vadd.f32 %v707, %v1175
        %1177 = vmatprep.mubr.f32.mxu0 0.0
        %1178 = vmatmul.mubr.f32.gmra.mrb[0].mxu0 %v669
        %v1179 = vpop.f32.mrb[0].mxu0
        %v1180 = vadd.f32 %v712, %v1179
        %v1181 = vpop.f32.mrb[0].mxu0
        %v1182 = vadd.f32 %v712, %v1181
        %1183 = vmatprep.mubr.f32.mxu0 0.0
        %1184 = vmatmul.mubr.f32.gmra.mrb[0].mxu0 %v670
        %v1185 = vpop.f32.mrb[0].mxu0
        %v1186 = vadd.f32 %v717, %v1185
        %v1187 = vpop.f32.mrb[0].mxu0
        %v1188 = vadd.f32 %v717, %v1187
        %1189 = vmatprep.mubr.f32.mxu0 0.0
        %1190 = vmatmul.mubr.f32.gmra.mrb[0].mxu0 %v671
        %v1191 = vpop.f32.mrb[0].mxu0
        %v1192 = vadd.f32 %v722, %v1191
        %v1193 = vpop.f32.mrb[0].mxu0
        %v1194 = vadd.f32 %v722, %v1193
        %1195 = vmatprep.mubr.f32.mxu0 0.0
        %1196 = vmatmul.mubr.f32.gmra.mrb[0].mxu0 %v672
        %v1197 = vpop.f32.mrb[0].mxu0
        %v1198 = vadd.f32 %v727, %v1197
        %v1199 = vpop.f32.mrb[0].mxu0
        %v1200 = vadd.f32 %v727, %v1199
        %1201 = vmatprep.mubr.f32.mxu0 0.0
        %1202 = vmatmul.mubr.f32.gmra.mrb[0].mxu0 %v673
        %v1203 = vpop.f32.mrb[0].mxu0
        %v1204 = vadd.f32 %v732, %v1203
        %v1205 = vpop.f32.mrb[0].mxu0
        %v1206 = vadd.f32 %v732, %v1205
        %1207 = vmatprep.mubr.f32.mxu0 0.0
        %1208 = vmatmul.mubr.f32.gmra.mrb[0].mxu0 %v674
        %v1209 = vpop.f32.mrb[0].mxu0
        %v1210 = vadd.f32 %v737, %v1209
        %v1211 = vpop.f32.mrb[0].mxu0
        %v1212 = vadd.f32 %v737, %v1211
        %1213 = vmatprep.mubr.f32.mxu0 0.0
        %1214 = vmatmul.mubr.f32.gmra.mrb[0].mxu0 %v675
        %v1215 = vpop.f32.mrb[0].mxu0
        %v1216 = vadd.f32 %v742, %v1215
        %v1217 = vpop.f32.mrb[0].mxu0
        %v1218 = vadd.f32 %v742, %v1217
        %1219 = vmatprep.mubr.f32.mxu0 0.0
        %1220 = vmatmul.mubr.f32.gmra.mrb[0].mxu0 %v676
        %v1221 = vpop.f32.mrb[0].mxu0
        %v1222 = vadd.f32 %v747, %v1221
        %v1223 = vpop.f32.mrb[0].mxu0
        %v1224 = vadd.f32 %v747, %v1223
        %1225 = vmatprep.mubr.f32.mxu0 0.0
        %1226 = vmatmul.mubr.f32.gmra.mrb[0].mxu0 %v677
        %v1227 = vpop.f32.mrb[0].mxu0
        %v1228 = vadd.f32 %v752, %v1227
        %v1229 = vpop.f32.mrb[0].mxu0
        %v1230 = vadd.f32 %v752, %v1229
        %1231 = vmatprep.mubr.f32.mxu0 0.0
        %1232 = vmatmul.mubr.f32.gmra.mrb[0].mxu0 %v678
        %v1233 = vpop.f32.mrb[0].mxu0
        %v1234 = vadd.f32 %v757, %v1233
        %v1235 = vpop.f32.mrb[0].mxu0
        %v1236 = vadd.f32 %v757, %v1235
        %1237 = vmatprep.mubr.f32.mxu0 0.0
        %1238 = vmatmul.mubr.f32.gmra.mrb[0].mxu0 %v679
        %v1239 = vpop.f32.mrb[0].mxu0
        %v1240 = vadd.f32 %v762, %v1239
        %v1241 = vpop.f32.mrb[0].mxu0
        %v1242 = vadd.f32 %v762, %v1241
        %1243 = vmatprep.mubr.f32.mxu0 0.0
        %1244 = vmatmul.mubr.f32.gmra.mrb[0].mxu0 %v680
        %v1245 = vpop.f32.mrb[0].mxu0
        %v1246 = vadd.f32 %v767, %v1245
        %v1247 = vpop.f32.mrb[0].mxu0
        %v1248 = vadd.f32 %v767, %v1247
        %1249 = vmatprep.mubr.f32.mxu0 0.0
        %1250 = vmatmul.mubr.f32.gmra.mrb[0].mxu0 %v681
        %v1251 = vpop.f32.mrb[0].mxu0
        %v1252 = vadd.f32 %v772, %v1251
        %v1253 = vpop.f32.mrb[0].mxu0
        %v1254 = vadd.f32 %v772, %v1253
        %1255 = vmatprep.mubr.f32.mxu0 0.0
        %1256 = vmatmul.mubr.f32.gmra.mrb[0].mxu0 %v682
        %v1257 = vpop.f32.mrb[0].mxu0
        %v1258 = vadd.f32 %v777, %v1257
        %v1259 = vpop.f32.mrb[0].mxu0
        %v1260 = vadd.f32 %v777, %v1259
        %1261 = vdwg.mxu0
        %v1262 = vld [vmem:[%s3] sm:$0xff]
        %v1263 = vld [vmem:[%s3 + $0x8] sm:$0xff]
        %v1264 = vld [vmem:[%s3 + $0x10] sm:$0xff]
        %v1265 = vld [vmem:[%s3 + $0x18] sm:$0xff]
        %v1266 = vld [vmem:[%s3 + $0x20] sm:$0xff]
        %v1267 = vld [vmem:[%s3 + $0x28] sm:$0xff]
        %v1268 = vld [vmem:[%s3 + $0x30] sm:$0xff]
        %v1269 = vld [vmem:[%s3 + $0x38] sm:$0xff]
        %v1270 = vld [vmem:[%s3 + $0x40] sm:$0xff]
        %v1271 = vld [vmem:[%s3 + $0x48] sm:$0xff]
        %v1272 = vld [vmem:[%s3 + $0x50] sm:$0xff]
        %v1273 = vld [vmem:[%s3 + $0x58] sm:$0xff]
        %v1274 = vld [vmem:[%s3 + $0x60] sm:$0xff]
        %v1275 = vld [vmem:[%s3 + $0x68] sm:$0xff]
        %v1276 = vld [vmem:[%s3 + $0x70] sm:$0xff]
        %v1277 = vld [vmem:[%s3 + $0x78] sm:$0xff]
        %1279 = vset.pattern.permute.xlu0 0
        %1280 = vperm.xlu0 %1279, %v1262
        %v1281 = vpop.permute.xlu0 %1280
        %1284 = vset.pattern.permute.xlu0 0
        %1285 = vperm.xlu0 %1284, %v1263
        %v1286 = vpop.permute.xlu0 %1285
        %1289 = vset.pattern.permute.xlu0 0
        %1290 = vperm.xlu0 %1289, %v1264
        %v1291 = vpop.permute.xlu0 %1290
        %1294 = vset.pattern.permute.xlu0 0
        %1295 = vperm.xlu0 %1294, %v1265
        %v1296 = vpop.permute.xlu0 %1295
        %1299 = vset.pattern.permute.xlu0 0
        %1300 = vperm.xlu0 %1299, %v1266
        %v1301 = vpop.permute.xlu0 %1300
        %1304 = vset.pattern.permute.xlu0 0
        %1305 = vperm.xlu0 %1304, %v1267
        %v1306 = vpop.permute.xlu0 %1305
        %1309 = vset.pattern.permute.xlu0 0
        %1310 = vperm.xlu0 %1309, %v1268
        %v1311 = vpop.permute.xlu0 %1310
        %1314 = vset.pattern.permute.xlu0 0
        %1315 = vperm.xlu0 %1314, %v1269
        %v1316 = vpop.permute.xlu0 %1315
        %1319 = vset.pattern.permute.xlu0 0
        %1320 = vperm.xlu0 %1319, %v1270
        %v1321 = vpop.permute.xlu0 %1320
        %1324 = vset.pattern.permute.xlu0 0
        %1325 = vperm.xlu0 %1324, %v1271
        %v1326 = vpop.permute.xlu0 %1325
        %1329 = vset.pattern.permute.xlu0 0
        %1330 = vperm.xlu0 %1329, %v1272
        %v1331 = vpop.permute.xlu0 %1330
        %1334 = vset.pattern.permute.xlu0 0
        %1335 = vperm.xlu0 %1334, %v1273
        %v1336 = vpop.permute.xlu0 %1335
        %1339 = vset.pattern.permute.xlu0 0
        %1340 = vperm.xlu0 %1339, %v1274
        %v1341 = vpop.permute.xlu0 %1340
        %1344 = vset.pattern.permute.xlu0 0
        %1345 = vperm.xlu0 %1344, %v1275
        %v1346 = vpop.permute.xlu0 %1345
        %1349 = vset.pattern.permute.xlu0 0
        %1350 = vperm.xlu0 %1349, %v1276
        %v1351 = vpop.permute.xlu0 %1350
        %1354 = vset.pattern.permute.xlu0 0
        %1355 = vperm.xlu0 %1354, %v1277
        %v1356 = vpop.permute.xlu0 %1355
        %v1358 = vmax.f32 %v846, %v1281
        %v1359 = vmax.f32 %v848, %v1281
        %v1360 = vmax.f32 %v1007, %v1281
        %v1361 = vmax.f32 %v1009, %v1281
        %v1362 = vmax.f32 %v1168, %v1281
        %v1363 = vmax.f32 %v1170, %v1281
        %v1364 = vmax.f32 %v852, %v1286
        %v1365 = vmax.f32 %v854, %v1286
        %v1366 = vmax.f32 %v1013, %v1286
        %v1367 = vmax.f32 %v1015, %v1286
        %v1368 = vmax.f32 %v1174, %v1286
        %v1369 = vmax.f32 %v1176, %v1286
        %v1370 = vmax.f32 %v858, %v1291
        %v1371 = vmax.f32 %v860, %v1291
        %v1372 = vmax.f32 %v1019, %v1291
        %v1373 = vmax.f32 %v1021, %v1291
        %v1374 = vmax.f32 %v1180, %v1291
        %v1375 = vmax.f32 %v1182, %v1291
        %v1376 = vmax.f32 %v864, %v1296
        %v1377 = vmax.f32 %v866, %v1296
        %v1378 = vmax.f32 %v1025, %v1296
        %v1379 = vmax.f32 %v1027, %v1296
        %v1380 = vmax.f32 %v1186, %v1296
        %v1381 = vmax.f32 %v1188, %v1296
        %v1382 = vmax.f32 %v870, %v1301
        %v1383 = vmax.f32 %v872, %v1301
        %v1384 = vmax.f32 %v1031, %v1301
        %v1385 = vmax.f32 %v1033, %v1301
        %v1386 = vmax.f32 %v1192, %v1301
        %v1387 = vmax.f32 %v1194, %v1301
        %v1388 = vmax.f32 %v876, %v1306
        %v1389 = vmax.f32 %v878, %v1306
        %v1390 = vmax.f32 %v1037, %v1306
        %v1391 = vmax.f32 %v1039, %v1306
        %v1392 = vmax.f32 %v1198, %v1306
        %v1393 = vmax.f32 %v1200, %v1306
        %v1394 = vmax.f32 %v882, %v1311
        %v1395 = vmax.f32 %v884, %v1311
        %v1396 = vmax.f32 %v1043, %v1311
        %v1397 = vmax.f32 %v1045, %v1311
        %v1398 = vmax.f32 %v1204, %v1311
        %v1399 = vmax.f32 %v1206, %v1311
        %v1400 = vmax.f32 %v888, %v1316
        %v1401 = vmax.f32 %v890, %v1316
        %v1402 = vmax.f32 %v1049, %v1316
        %v1403 = vmax.f32 %v1051, %v1316
        %v1404 = vmax.f32 %v1210, %v1316
        %v1405 = vmax.f32 %v1212, %v1316
        %v1406 = vmax.f32 %v894, %v1321
        %v1407 = vmax.f32 %v896, %v1321
        %v1408 = vmax.f32 %v1055, %v1321
        %v1409 = vmax.f32 %v1057, %v1321
        %v1410 = vmax.f32 %v1216, %v1321
        %v1411 = vmax.f32 %v1218, %v1321
        %v1412 = vmax.f32 %v900, %v1326
        %v1413 = vmax.f32 %v902, %v1326
        %v1414 = vmax.f32 %v1061, %v1326
        %v1415 = vmax.f32 %v1063, %v1326
        %v1416 = vmax.f32 %v1222, %v1326
        %v1417 = vmax.f32 %v1224, %v1326
        %v1418 = vmax.f32 %v906, %v1331
        %v1419 = vmax.f32 %v908, %v1331
        %v1420 = vmax.f32 %v1067, %v1331
        %v1421 = vmax.f32 %v1069, %v1331
        %v1422 = vmax.f32 %v1228, %v1331
        %v1423 = vmax.f32 %v1230, %v1331
        %v1424 = vmax.f32 %v912, %v1336
        %v1425 = vmax.f32 %v914, %v1336
        %v1426 = vmax.f32 %v1073, %v1336
        %v1427 = vmax.f32 %v1075, %v1336
        %v1428 = vmax.f32 %v1234, %v1336
        %v1429 = vmax.f32 %v1236, %v1336
        %v1430 = vmax.f32 %v918, %v1341
        %v1431 = vmax.f32 %v920, %v1341
        %v1432 = vmax.f32 %v1079, %v1341
        %v1433 = vmax.f32 %v1081, %v1341
        %v1434 = vmax.f32 %v1240, %v1341
        %v1435 = vmax.f32 %v1242, %v1341
        %v1436 = vmax.f32 %v924, %v1346
        %v1437 = vmax.f32 %v926, %v1346
        %v1438 = vmax.f32 %v1085, %v1346
        %v1439 = vmax.f32 %v1087, %v1346
        %v1440 = vmax.f32 %v1246, %v1346
        %v1441 = vmax.f32 %v1248, %v1346
        %v1442 = vmax.f32 %v930, %v1351
        %v1443 = vmax.f32 %v932, %v1351
        %v1444 = vmax.f32 %v1091, %v1351
        %v1445 = vmax.f32 %v1093, %v1351
        %v1446 = vmax.f32 %v1252, %v1351
        %v1447 = vmax.f32 %v1254, %v1351
        %v1448 = vmax.f32 %v936, %v1356
        %v1449 = vmax.f32 %v938, %v1356
        %v1450 = vmax.f32 %v1097, %v1356
        %v1451 = vmax.f32 %v1099, %v1356
        %v1452 = vmax.f32 %v1258, %v1356
        %v1453 = vmax.f32 %v1260, %v1356
        %v1454 = vld [vmem:[%s4] sm:$0xff]
        %v1455 = vld [vmem:[%s4 + $0x8] sm:$0xff]
        %v1456 = vld [vmem:[%s4 + $0x10] sm:$0xff]
        %v1457 = vld [vmem:[%s4 + $0x18] sm:$0xff]
        %v1458 = vld [vmem:[%s4 + $0x20] sm:$0xff]
        %v1459 = vld [vmem:[%s4 + $0x28] sm:$0xff]
        %v1460 = vld [vmem:[%s4 + $0x30] sm:$0xff]
        %v1461 = vld [vmem:[%s4 + $0x38] sm:$0xff]
        %v1462 = vld [vmem:[%s5] sm:$0xff]
        %v1463 = vld [vmem:[%s5 + $0x8] sm:$0xff]
        %v1464 = vld [vmem:[%s5 + $0x10] sm:$0xff]
        %v1465 = vld [vmem:[%s5 + $0x18] sm:$0xff]
        %v1466 = vld [vmem:[%s5 + $0x20] sm:$0xff]
        %v1467 = vld [vmem:[%s5 + $0x28] sm:$0xff]
        %v1468 = vld [vmem:[%s5 + $0x30] sm:$0xff]
        %v1469 = vld [vmem:[%s5 + $0x38] sm:$0xff]
        %1471 = vset.pattern.permute.xlu0 0
        %1472 = vperm.xlu0 %1471, %v1462
        %v1473 = vpop.permute.xlu0 %1472
        %1476 = vset.pattern.permute.xlu0 0
        %1477 = vperm.xlu0 %1476, %v1463
        %v1478 = vpop.permute.xlu0 %1477
        %1481 = vset.pattern.permute.xlu0 0
        %1482 = vperm.xlu0 %1481, %v1464
        %v1483 = vpop.permute.xlu0 %1482
        %1486 = vset.pattern.permute.xlu0 0
        %1487 = vperm.xlu0 %1486, %v1465
        %v1488 = vpop.permute.xlu0 %1487
        %1491 = vset.pattern.permute.xlu0 0
        %1492 = vperm.xlu0 %1491, %v1466
        %v1493 = vpop.permute.xlu0 %1492
        %1496 = vset.pattern.permute.xlu0 0
        %1497 = vperm.xlu0 %1496, %v1467
        %v1498 = vpop.permute.xlu0 %1497
        %1501 = vset.pattern.permute.xlu0 0
        %1502 = vperm.xlu0 %1501, %v1468
        %v1503 = vpop.permute.xlu0 %1502
        %1506 = vset.pattern.permute.xlu0 0
        %1507 = vperm.xlu0 %1506, %v1469
        %v1508 = vpop.permute.xlu0 %1507
        %1510 = vmatprep.subr.mxu0 %v1359
        %1511 = vmatpush1.msra.mxu0 %v1358
        %1512 = vmatprep.subr.mxu0 %v1365
        %1513 = vmatpush1.msra.mxu0 %v1364
        %1514 = vmatprep.subr.mxu0 %v1371
        %1515 = vmatpush1.msra.mxu0 %v1370
        %1516 = vmatprep.subr.mxu0 %v1377
        %1517 = vmatpush1.msra.mxu0 %v1376
        %1518 = vmatprep.subr.mxu0 %v1383
        %1519 = vmatpush1.msra.mxu0 %v1382
        %1520 = vmatprep.subr.mxu0 %v1389
        %1521 = vmatpush1.msra.mxu0 %v1388
        %1522 = vmatprep.subr.mxu0 %v1395
        %1523 = vmatpush1.msra.mxu0 %v1394
        %1524 = vmatprep.subr.mxu0 %v1401
        %1525 = vmatpush1.msra.mxu0 %v1400
        %1526 = vmatprep.subr.mxu0 %v1407
        %1527 = vmatpush1.msra.mxu0 %v1406
        %1528 = vmatprep.subr.mxu0 %v1413
        %1529 = vmatpush1.msra.mxu0 %v1412
        %1530 = vmatprep.subr.mxu0 %v1419
        %1531 = vmatpush1.msra.mxu0 %v1418
        %1532 = vmatprep.subr.mxu0 %v1425
        %1533 = vmatpush1.msra.mxu0 %v1424
        %1534 = vmatprep.subr.mxu0 %v1431
        %1535 = vmatpush1.msra.mxu0 %v1430
        %1536 = vmatprep.subr.mxu0 %v1437
        %1537 = vmatpush1.msra.mxu0 %v1436
        %1538 = vmatprep.subr.mxu0 %v1443
        %1539 = vmatpush1.msra.mxu0 %v1442
        %1540 = vmatprep.subr.mxu0 %v1449
        %1541 = vmatpush1.msra.mxu0 %v1448
        %1542 = vmatprep.subr.mxu0 0.0
        %1543 = vmatpush1.msra.mxu0 0.0
        %1544 = vmatprep.subr.mxu0 0.0
        %1545 = vmatpush1.msra.mxu0 0.0
        %1546 = vmatprep.subr.mxu0 0.0
        %1547 = vmatpush1.msra.mxu0 0.0
        %1548 = vmatprep.subr.mxu0 0.0
        %1549 = vmatpush1.msra.mxu0 0.0
        %1550 = vmatprep.subr.mxu0 0.0
        %1551 = vmatpush1.msra.mxu0 0.0
        %1552 = vmatprep.subr.mxu0 0.0
        %1553 = vmatpush1.msra.mxu0 0.0
        %1554 = vmatprep.subr.mxu0 0.0
        %1555 = vmatpush1.msra.mxu0 0.0
        %1556 = vmatprep.subr.mxu0 0.0
        %1557 = vmatpush1.msra.mxu0 0.0
        %1558 = vmatprep.subr.mxu0 0.0
        %1559 = vmatpush1.msra.mxu0 0.0
        %1560 = vmatprep.subr.mxu0 0.0
        %1561 = vmatpush1.msra.mxu0 0.0
        %1562 = vmatprep.subr.mxu0 0.0
        %1563 = vmatpush1.msra.mxu0 0.0
        %1564 = vmatprep.subr.mxu0 0.0
        %1565 = vmatpush1.msra.mxu0 0.0
        %1566 = vmatprep.subr.mxu0 0.0
        %1567 = vmatpush1.msra.mxu0 0.0
        %1568 = vmatprep.subr.mxu0 0.0
        %1569 = vmatpush1.msra.mxu0 0.0
        %1570 = vmatprep.subr.mxu0 0.0
        %1571 = vmatpush1.msra.mxu0 0.0
        %1572 = vmatprep.subr.mxu0 0.0
        %1573 = vmatpush1.msra.mxu0 0.0
        %1574 = vmatprep.mubr.f32.mxu0 0.0
        %1575 = vmatmul.mubr.f32.gmra.mrb[0].mxu0 %v1454
        %v1576 = vpop.f32.mrb[0].mxu0
        %v1577 = vadd.f32 %v1473, %v1576
        %v1578 = vpop.f32.mrb[0].mxu0
        %v1579 = vadd.f32 %v1473, %v1578
        %1580 = vmatprep.mubr.f32.mxu0 0.0
        %1581 = vmatmul.mubr.f32.gmra.mrb[0].mxu0 %v1455
        %v1582 = vpop.f32.mrb[0].mxu0
        %v1583 = vadd.f32 %v1478, %v1582
        %v1584 = vpop.f32.mrb[0].mxu0
        %v1585 = vadd.f32 %v1478, %v1584
        %1586 = vmatprep.mubr.f32.mxu0 0.0
        %1587 = vmatmul.mubr.f32.gmra.mrb[0].mxu0 %v1456
        %v1588 = vpop.f32.mrb[0].mxu0
        %v1589 = vadd.f32 %v1483, %v1588
        %v1590 = vpop.f32.mrb[0].mxu0
        %v1591 = vadd.f32 %v1483, %v1590
        %1592 = vmatprep.mubr.f32.mxu0 0.0
        %1593 = vmatmul.mubr.f32.gmra.mrb[0].mxu0 %v1457
        %v1594 = vpop.f32.mrb[0].mxu0
        %v1595 = vadd.f32 %v1488, %v1594
        %v1596 = vpop.f32.mrb[0].mxu0
        %v1597 = vadd.f32 %v1488, %v1596
        %1598 = vmatprep.mubr.f32.mxu0 0.0
        %1599 = vmatmul.mubr.f32.gmra.mrb[0].mxu0 %v1458
        %v1600 = vpop.f32.mrb[0].mxu0
        %v1601 = vadd.f32 %v1493, %v1600
        %v1602 = vpop.f32.mrb[0].mxu0
        %v1603 = vadd.f32 %v1493, %v1602
        %1604 = vmatprep.mubr.f32.mxu0 0.0
        %1605 = vmatmul.mubr.f32.gmra.mrb[0].mxu0 %v1459
        %v1606 = vpop.f32.mrb[0].mxu0
        %v1607 = vadd.f32 %v1498, %v1606
        %v1608 = vpop.f32.mrb[0].mxu0
        %v1609 = vadd.f32 %v1498, %v1608
        %1610 = vmatprep.mubr.f32.mxu0 0.0
        %1611 = vmatmul.mubr.f32.gmra.mrb[0].mxu0 %v1460
        %v1612 = vpop.f32.mrb[0].mxu0
        %v1613 = vadd.f32 %v1503, %v1612
        %v1614 = vpop.f32.mrb[0].mxu0
        %v1615 = vadd.f32 %v1503, %v1614
        %1616 = vmatprep.mubr.f32.mxu0 0.0
        %1617 = vmatmul.mubr.f32.gmra.mrb[0].mxu0 %v1461
        %v1618 = vpop.f32.mrb[0].mxu0
        %v1619 = vadd.f32 %v1508, %v1618
        %v1620 = vpop.f32.mrb[0].mxu0
        %v1621 = vadd.f32 %v1508, %v1620
        %1622 = vdwg.mxu0
        %1623 = vmatprep.subr.mxu0 %v1361
        %1624 = vmatpush1.msra.mxu0 %v1360
        %1625 = vmatprep.subr.mxu0 %v1367
        %1626 = vmatpush1.msra.mxu0 %v1366
        %1627 = vmatprep.subr.mxu0 %v1373
        %1628 = vmatpush1.msra.mxu0 %v1372
        %1629 = vmatprep.subr.mxu0 %v1379
        %1630 = vmatpush1.msra.mxu0 %v1378
        %1631 = vmatprep.subr.mxu0 %v1385
        %1632 = vmatpush1.msra.mxu0 %v1384
        %1633 = vmatprep.subr.mxu0 %v1391
        %1634 = vmatpush1.msra.mxu0 %v1390
        %1635 = vmatprep.subr.mxu0 %v1397
        %1636 = vmatpush1.msra.mxu0 %v1396
        %1637 = vmatprep.subr.mxu0 %v1403
        %1638 = vmatpush1.msra.mxu0 %v1402
        %1639 = vmatprep.subr.mxu0 %v1409
        %1640 = vmatpush1.msra.mxu0 %v1408
        %1641 = vmatprep.subr.mxu0 %v1415
        %1642 = vmatpush1.msra.mxu0 %v1414
        %1643 = vmatprep.subr.mxu0 %v1421
        %1644 = vmatpush1.msra.mxu0 %v1420
        %1645 = vmatprep.subr.mxu0 %v1427
        %1646 = vmatpush1.msra.mxu0 %v1426
        %1647 = vmatprep.subr.mxu0 %v1433
        %1648 = vmatpush1.msra.mxu0 %v1432
        %1649 = vmatprep.subr.mxu0 %v1439
        %1650 = vmatpush1.msra.mxu0 %v1438
        %1651 = vmatprep.subr.mxu0 %v1445
        %1652 = vmatpush1.msra.mxu0 %v1444
        %1653 = vmatprep.subr.mxu0 %v1451
        %1654 = vmatpush1.msra.mxu0 %v1450
        %1655 = vmatprep.subr.mxu0 0.0
        %1656 = vmatpush1.msra.mxu0 0.0
        %1657 = vmatprep.subr.mxu0 0.0
        %1658 = vmatpush1.msra.mxu0 0.0
        %1659 = vmatprep.subr.mxu0 0.0
        %1660 = vmatpush1.msra.mxu0 0.0
        %1661 = vmatprep.subr.mxu0 0.0
        %1662 = vmatpush1.msra.mxu0 0.0
        %1663 = vmatprep.subr.mxu0 0.0
        %1664 = vmatpush1.msra.mxu0 0.0
        %1665 = vmatprep.subr.mxu0 0.0
        %1666 = vmatpush1.msra.mxu0 0.0
        %1667 = vmatprep.subr.mxu0 0.0
        %1668 = vmatpush1.msra.mxu0 0.0
        %1669 = vmatprep.subr.mxu0 0.0
        %1670 = vmatpush1.msra.mxu0 0.0
        %1671 = vmatprep.subr.mxu0 0.0
        %1672 = vmatpush1.msra.mxu0 0.0
        %1673 = vmatprep.subr.mxu0 0.0
        %1674 = vmatpush1.msra.mxu0 0.0
        %1675 = vmatprep.subr.mxu0 0.0
        %1676 = vmatpush1.msra.mxu0 0.0
        %1677 = vmatprep.subr.mxu0 0.0
        %1678 = vmatpush1.msra.mxu0 0.0
        %1679 = vmatprep.subr.mxu0 0.0
        %1680 = vmatpush1.msra.mxu0 0.0
        %1681 = vmatprep.subr.mxu0 0.0
        %1682 = vmatpush1.msra.mxu0 0.0
        %1683 = vmatprep.subr.mxu0 0.0
        %1684 = vmatpush1.msra.mxu0 0.0
        %1685 = vmatprep.subr.mxu0 0.0
        %1686 = vmatpush1.msra.mxu0 0.0
        %1687 = vmatprep.mubr.f32.mxu0 0.0
        %1688 = vmatmul.mubr.f32.gmra.mrb[0].mxu0 %v1454
        %v1689 = vpop.f32.mrb[0].mxu0
        %v1690 = vadd.f32 %v1473, %v1689
        %v1691 = vpop.f32.mrb[0].mxu0
        %v1692 = vadd.f32 %v1473, %v1691
        %1693 = vmatprep.mubr.f32.mxu0 0.0
        %1694 = vmatmul.mubr.f32.gmra.mrb[0].mxu0 %v1455
        %v1695 = vpop.f32.mrb[0].mxu0
        %v1696 = vadd.f32 %v1478, %v1695
        %v1697 = vpop.f32.mrb[0].mxu0
        %v1698 = vadd.f32 %v1478, %v1697
        %1699 = vmatprep.mubr.f32.mxu0 0.0
        %1700 = vmatmul.mubr.f32.gmra.mrb[0].mxu0 %v1456
        %v1701 = vpop.f32.mrb[0].mxu0
        %v1702 = vadd.f32 %v1483, %v1701
        %v1703 = vpop.f32.mrb[0].mxu0
        %v1704 = vadd.f32 %v1483, %v1703
        %1705 = vmatprep.mubr.f32.mxu0 0.0
        %1706 = vmatmul.mubr.f32.gmra.mrb[0].mxu0 %v1457
        %v1707 = vpop.f32.mrb[0].mxu0
        %v1708 = vadd.f32 %v1488, %v1707
        %v1709 = vpop.f32.mrb[0].mxu0
        %v1710 = vadd.f32 %v1488, %v1709
        %1711 = vmatprep.mubr.f32.mxu0 0.0
        %1712 = vmatmul.mubr.f32.gmra.mrb[0].mxu0 %v1458
        %v1713 = vpop.f32.mrb[0].mxu0
        %v1714 = vadd.f32 %v1493, %v1713
        %v1715 = vpop.f32.mrb[0].mxu0
        %v1716 = vadd.f32 %v1493, %v1715
        %1717 = vmatprep.mubr.f32.mxu0 0.0
        %1718 = vmatmul.mubr.f32.gmra.mrb[0].mxu0 %v1459
        %v1719 = vpop.f32.mrb[0].mxu0
        %v1720 = vadd.f32 %v1498, %v1719
        %v1721 = vpop.f32.mrb[0].mxu0
        %v1722 = vadd.f32 %v1498, %v1721
        %1723 = vmatprep.mubr.f32.mxu0 0.0
        %1724 = vmatmul.mubr.f32.gmra.mrb[0].mxu0 %v1460
        %v1725 = vpop.f32.mrb[0].mxu0
        %v1726 = vadd.f32 %v1503, %v1725
        %v1727 = vpop.f32.mrb[0].mxu0
        %v1728 = vadd.f32 %v1503, %v1727
        %1729 = vmatprep.mubr.f32.mxu0 0.0
        %1730 = vmatmul.mubr.f32.gmra.mrb[0].mxu0 %v1461
        %v1731 = vpop.f32.mrb[0].mxu0
        %v1732 = vadd.f32 %v1508, %v1731
        %v1733 = vpop.f32.mrb[0].mxu0
        %v1734 = vadd.f32 %v1508, %v1733
        %1735 = vdwg.mxu0
        %1736 = vmatprep.subr.mxu0 %v1363
        %1737 = vmatpush1.msra.mxu0 %v1362
        %1738 = vmatprep.subr.mxu0 %v1369
        %1739 = vmatpush1.msra.mxu0 %v1368
        %1740 = vmatprep.subr.mxu0 %v1375
        %1741 = vmatpush1.msra.mxu0 %v1374
        %1742 = vmatprep.subr.mxu0 %v1381
        %1743 = vmatpush1.msra.mxu0 %v1380
        %1744 = vmatprep.subr.mxu0 %v1387
        %1745 = vmatpush1.msra.mxu0 %v1386
        %1746 = vmatprep.subr.mxu0 %v1393
        %1747 = vmatpush1.msra.mxu0 %v1392
        %1748 = vmatprep.subr.mxu0 %v1399
        %1749 = vmatpush1.msra.mxu0 %v1398
        %1750 = vmatprep.subr.mxu0 %v1405
        %1751 = vmatpush1.msra.mxu0 %v1404
        %1752 = vmatprep.subr.mxu0 %v1411
        %1753 = vmatpush1.msra.mxu0 %v1410
        %1754 = vmatprep.subr.mxu0 %v1417
        %1755 = vmatpush1.msra.mxu0 %v1416
        %1756 = vmatprep.subr.mxu0 %v1423
        %1757 = vmatpush1.msra.mxu0 %v1422
        %1758 = vmatprep.subr.mxu0 %v1429
        %1759 = vmatpush1.msra.mxu0 %v1428
        %1760 = vmatprep.subr.mxu0 %v1435
        %1761 = vmatpush1.msra.mxu0 %v1434
        %1762 = vmatprep.subr.mxu0 %v1441
        %1763 = vmatpush1.msra.mxu0 %v1440
        %1764 = vmatprep.subr.mxu0 %v1447
        %1765 = vmatpush1.msra.mxu0 %v1446
        %1766 = vmatprep.subr.mxu0 %v1453
        %1767 = vmatpush1.msra.mxu0 %v1452
        %1768 = vmatprep.subr.mxu0 0.0
        %1769 = vmatpush1.msra.mxu0 0.0
        %1770 = vmatprep.subr.mxu0 0.0
        %1771 = vmatpush1.msra.mxu0 0.0
        %1772 = vmatprep.subr.mxu0 0.0
        %1773 = vmatpush1.msra.mxu0 0.0
        %1774 = vmatprep.subr.mxu0 0.0
        %1775 = vmatpush1.msra.mxu0 0.0
        %1776 = vmatprep.subr.mxu0 0.0
        %1777 = vmatpush1.msra.mxu0 0.0
        %1778 = vmatprep.subr.mxu0 0.0
        %1779 = vmatpush1.msra.mxu0 0.0
        %1780 = vmatprep.subr.mxu0 0.0
        %1781 = vmatpush1.msra.mxu0 0.0
        %1782 = vmatprep.subr.mxu0 0.0
        %1783 = vmatpush1.msra.mxu0 0.0
        %1784 = vmatprep.subr.mxu0 0.0
        %1785 = vmatpush1.msra.mxu0 0.0
        %1786 = vmatprep.subr.mxu0 0.0
        %1787 = vmatpush1.msra.mxu0 0.0
        %1788 = vmatprep.subr.mxu0 0.0
        %1789 = vmatpush1.msra.mxu0 0.0
        %1790 = vmatprep.subr.mxu0 0.0
        %1791 = vmatpush1.msra.mxu0 0.0
        %1792 = vmatprep.subr.mxu0 0.0
        %1793 = vmatpush1.msra.mxu0 0.0
        %1794 = vmatprep.subr.mxu0 0.0
        %1795 = vmatpush1.msra.mxu0 0.0
        %1796 = vmatprep.subr.mxu0 0.0
        %1797 = vmatpush1.msra.mxu0 0.0
        %1798 = vmatprep.subr.mxu0 0.0
        %1799 = vmatpush1.msra.mxu0 0.0
        %1800 = vmatprep.mubr.f32.mxu0 0.0
        %1801 = vmatmul.mubr.f32.gmra.mrb[0].mxu0 %v1454
        %v1802 = vpop.f32.mrb[0].mxu0
        %v1803 = vadd.f32 %v1473, %v1802
        %v1804 = vpop.f32.mrb[0].mxu0
        %v1805 = vadd.f32 %v1473, %v1804
        %1806 = vmatprep.mubr.f32.mxu0 0.0
        %1807 = vmatmul.mubr.f32.gmra.mrb[0].mxu0 %v1455
        %v1808 = vpop.f32.mrb[0].mxu0
        %v1809 = vadd.f32 %v1478, %v1808
        %v1810 = vpop.f32.mrb[0].mxu0
        %v1811 = vadd.f32 %v1478, %v1810
        %1812 = vmatprep.mubr.f32.mxu0 0.0
        %1813 = vmatmul.mubr.f32.gmra.mrb[0].mxu0 %v1456
        %v1814 = vpop.f32.mrb[0].mxu0
        %v1815 = vadd.f32 %v1483, %v1814
        %v1816 = vpop.f32.mrb[0].mxu0
        %v1817 = vadd.f32 %v1483, %v1816
        %1818 = vmatprep.mubr.f32.mxu0 0.0
        %1819 = vmatmul.mubr.f32.gmra.mrb[0].mxu0 %v1457
        %v1820 = vpop.f32.mrb[0].mxu0
        %v1821 = vadd.f32 %v1488, %v1820
        %v1822 = vpop.f32.mrb[0].mxu0
        %v1823 = vadd.f32 %v1488, %v1822
        %1824 = vmatprep.mubr.f32.mxu0 0.0
        %1825 = vmatmul.mubr.f32.gmra.mrb[0].mxu0 %v1458
        %v1826 = vpop.f32.mrb[0].mxu0
        %v1827 = vadd.f32 %v1493, %v1826
        %v1828 = vpop.f32.mrb[0].mxu0
        %v1829 = vadd.f32 %v1493, %v1828
        %1830 = vmatprep.mubr.f32.mxu0 0.0
        %1831 = vmatmul.mubr.f32.gmra.mrb[0].mxu0 %v1459
        %v1832 = vpop.f32.mrb[0].mxu0
        %v1833 = vadd.f32 %v1498, %v1832
        %v1834 = vpop.f32.mrb[0].mxu0
        %v1835 = vadd.f32 %v1498, %v1834
        %1836 = vmatprep.mubr.f32.mxu0 0.0
        %1837 = vmatmul.mubr.f32.gmra.mrb[0].mxu0 %v1460
        %v1838 = vpop.f32.mrb[0].mxu0
        %v1839 = vadd.f32 %v1503, %v1838
        %v1840 = vpop.f32.mrb[0].mxu0
        %v1841 = vadd.f32 %v1503, %v1840
        %1842 = vmatprep.mubr.f32.mxu0 0.0
        %1843 = vmatmul.mubr.f32.gmra.mrb[0].mxu0 %v1461
        %v1844 = vpop.f32.mrb[0].mxu0
        %v1845 = vadd.f32 %v1508, %v1844
        %v1846 = vpop.f32.mrb[0].mxu0
        %v1847 = vadd.f32 %v1508, %v1846
        %1848 = vdwg.mxu0
        %v1849 = vmax.f32 %v1577, 0.0
        %v1850 = vmax.f32 %v1579, 0.0
        %v1851 = vmax.f32 %v1690, 0.0
        %v1852 = vmax.f32 %v1692, 0.0
        %v1853 = vmax.f32 %v1803, 0.0
        %v1854 = vmax.f32 %v1805, 0.0
        %v1855 = vmax.f32 %v1583, 0.0
        %v1856 = vmax.f32 %v1585, 0.0
        %v1857 = vmax.f32 %v1696, 0.0
        %v1858 = vmax.f32 %v1698, 0.0
        %v1859 = vmax.f32 %v1809, 0.0
        %v1860 = vmax.f32 %v1811, 0.0
        %v1861 = vmax.f32 %v1589, 0.0
        %v1862 = vmax.f32 %v1591, 0.0
        %v1863 = vmax.f32 %v1702, 0.0
        %v1864 = vmax.f32 %v1704, 0.0
        %v1865 = vmax.f32 %v1815, 0.0
        %v1866 = vmax.f32 %v1817, 0.0
        %v1867 = vmax.f32 %v1595, 0.0
        %v1868 = vmax.f32 %v1597, 0.0
        %v1869 = vmax.f32 %v1708, 0.0
        %v1870 = vmax.f32 %v1710, 0.0
        %v1871 = vmax.f32 %v1821, 0.0
        %v1872 = vmax.f32 %v1823, 0.0
        %v1873 = vmax.f32 %v1601, 0.0
        %v1874 = vmax.f32 %v1603, 0.0
        %v1875 = vmax.f32 %v1714, 0.0
        %v1876 = vmax.f32 %v1716, 0.0
        %v1877 = vmax.f32 %v1827, 0.0
        %v1878 = vmax.f32 %v1829, 0.0
        %v1879 = vmax.f32 %v1607, 0.0
        %v1880 = vmax.f32 %v1609, 0.0
        %v1881 = vmax.f32 %v1720, 0.0
        %v1882 = vmax.f32 %v1722, 0.0
        %v1883 = vmax.f32 %v1833, 0.0
        %v1884 = vmax.f32 %v1835, 0.0
        %v1885 = vmax.f32 %v1613, 0.0
        %v1886 = vmax.f32 %v1615, 0.0
        %v1887 = vmax.f32 %v1726, 0.0
        %v1888 = vmax.f32 %v1728, 0.0
        %v1889 = vmax.f32 %v1839, 0.0
        %v1890 = vmax.f32 %v1841, 0.0
        %v1891 = vmax.f32 %v1619, 0.0
        %v1892 = vmax.f32 %v1621, 0.0
        %v1893 = vmax.f32 %v1732, 0.0
        %v1894 = vmax.f32 %v1734, 0.0
        %v1895 = vmax.f32 %v1845, 0.0
        %v1896 = vmax.f32 %v1847, 0.0
        %v1897 = vld [vmem:[%s6] sm:$0xff]
        %v1898 = vld [vmem:[%s6 + $0x8] sm:$0xff]
        %v1899 = vld [vmem:[%s6 + $0x10] sm:$0xff]
        %v1900 = vld [vmem:[%s6 + $0x18] sm:$0xff]
        %v1901 = vld [vmem:[%s6 + $0x20] sm:$0xff]
        %v1902 = vld [vmem:[%s6 + $0x28] sm:$0xff]
        %v1903 = vld [vmem:[%s6 + $0x30] sm:$0xff]
        %v1904 = vld [vmem:[%s6 + $0x38] sm:$0xff]
        %v1905 = vld [vmem:[%s7] sm:$0xff]
        %v1906 = vld [vmem:[%s7 + $0x8] sm:$0xff]
        %v1907 = vld [vmem:[%s7 + $0x10] sm:$0xff]
        %v1908 = vld [vmem:[%s7 + $0x18] sm:$0xff]
        %v1909 = vld [vmem:[%s7 + $0x20] sm:$0xff]
        %v1910 = vld [vmem:[%s7 + $0x28] sm:$0xff]
        %v1911 = vld [vmem:[%s7 + $0x30] sm:$0xff]
        %v1912 = vld [vmem:[%s7 + $0x38] sm:$0xff]
        %1914 = vset.pattern.permute.xlu0 0
        %1915 = vperm.xlu0 %1914, %v1905
        %v1916 = vpop.permute.xlu0 %1915
        %1919 = vset.pattern.permute.xlu0 0
        %1920 = vperm.xlu0 %1919, %v1906
        %v1921 = vpop.permute.xlu0 %1920
        %1924 = vset.pattern.permute.xlu0 0
        %1925 = vperm.xlu0 %1924, %v1907
        %v1926 = vpop.permute.xlu0 %1925
        %1929 = vset.pattern.permute.xlu0 0
        %1930 = vperm.xlu0 %1929, %v1908
        %v1931 = vpop.permute.xlu0 %1930
        %1934 = vset.pattern.permute.xlu0 0
        %1935 = vperm.xlu0 %1934, %v1909
        %v1936 = vpop.permute.xlu0 %1935
        %1939 = vset.pattern.permute.xlu0 0
        %1940 = vperm.xlu0 %1939, %v1910
        %v1941 = vpop.permute.xlu0 %1940
        %1944 = vset.pattern.permute.xlu0 0
        %1945 = vperm.xlu0 %1944, %v1911
        %v1946 = vpop.permute.xlu0 %1945
        %1949 = vset.pattern.permute.xlu0 0
        %1950 = vperm.xlu0 %1949, %v1912
        %v1951 = vpop.permute.xlu0 %1950
        %vm1953 = vcmask 523264
        %v1955 = vsel %vm1953, %v1897, 0
        %v1958 = vsel %vm1953, %v1898, 0
        %v1961 = vsel %vm1953, %v1899, 0
        %v1964 = vsel %vm1953, %v1900, 0
        %v1967 = vsel %vm1953, %v1901, 0
        %v1970 = vsel %vm1953, %v1902, 0
        %v1973 = vsel %vm1953, %v1903, 0
        %v1976 = vsel %vm1953, %v1904, 0
        %1978 = vmatprep.subr.mxu0 %v1850
        %1979 = vmatpush1.msra.mxu0 %v1849
        %1980 = vmatprep.subr.mxu0 %v1856
        %1981 = vmatpush1.msra.mxu0 %v1855
        %1982 = vmatprep.subr.mxu0 %v1862
        %1983 = vmatpush1.msra.mxu0 %v1861
        %1984 = vmatprep.subr.mxu0 %v1868
        %1985 = vmatpush1.msra.mxu0 %v1867
        %1986 = vmatprep.subr.mxu0 %v1874
        %1987 = vmatpush1.msra.mxu0 %v1873
        %1988 = vmatprep.subr.mxu0 %v1880
        %1989 = vmatpush1.msra.mxu0 %v1879
        %1990 = vmatprep.subr.mxu0 %v1886
        %1991 = vmatpush1.msra.mxu0 %v1885
        %1992 = vmatprep.subr.mxu0 %v1892
        %1993 = vmatpush1.msra.mxu0 %v1891
        %1994 = vmatprep.subr.mxu0 0.0
        %1995 = vmatpush1.msra.mxu0 0.0
        %1996 = vmatprep.subr.mxu0 0.0
        %1997 = vmatpush1.msra.mxu0 0.0
        %1998 = vmatprep.subr.mxu0 0.0
        %1999 = vmatpush1.msra.mxu0 0.0
        %2000 = vmatprep.subr.mxu0 0.0
        %2001 = vmatpush1.msra.mxu0 0.0
        %2002 = vmatprep.subr.mxu0 0.0
        %2003 = vmatpush1.msra.mxu0 0.0
        %2004 = vmatprep.subr.mxu0 0.0
        %2005 = vmatpush1.msra.mxu0 0.0
        %2006 = vmatprep.subr.mxu0 0.0
        %2007 = vmatpush1.msra.mxu0 0.0
        %2008 = vmatprep.subr.mxu0 0.0
        %2009 = vmatpush1.msra.mxu0 0.0
        %2010 = vmatprep.subr.mxu0 0.0
        %2011 = vmatpush1.msra.mxu0 0.0
        %2012 = vmatprep.subr.mxu0 0.0
        %2013 = vmatpush1.msra.mxu0 0.0
        %2014 = vmatprep.subr.mxu0 0.0
        %2015 = vmatpush1.msra.mxu0 0.0
        %2016 = vmatprep.subr.mxu0 0.0
        %2017 = vmatpush1.msra.mxu0 0.0
        %2018 = vmatprep.subr.mxu0 0.0
        %2019 = vmatpush1.msra.mxu0 0.0
        %2020 = vmatprep.subr.mxu0 0.0
        %2021 = vmatpush1.msra.mxu0 0.0
        %2022 = vmatprep.subr.mxu0 0.0
        %2023 = vmatpush1.msra.mxu0 0.0
        %2024 = vmatprep.subr.mxu0 0.0
        %2025 = vmatpush1.msra.mxu0 0.0
        %2026 = vmatprep.subr.mxu0 0.0
        %2027 = vmatpush1.msra.mxu0 0.0
        %2028 = vmatprep.subr.mxu0 0.0
        %2029 = vmatpush1.msra.mxu0 0.0
        %2030 = vmatprep.subr.mxu0 0.0
        %2031 = vmatpush1.msra.mxu0 0.0
        %2032 = vmatprep.subr.mxu0 0.0
        %2033 = vmatpush1.msra.mxu0 0.0
        %2034 = vmatprep.subr.mxu0 0.0
        %2035 = vmatpush1.msra.mxu0 0.0
        %2036 = vmatprep.subr.mxu0 0.0
        %2037 = vmatpush1.msra.mxu0 0.0
        %2038 = vmatprep.subr.mxu0 0.0
        %2039 = vmatpush1.msra.mxu0 0.0
        %2040 = vmatprep.subr.mxu0 0.0
        %2041 = vmatpush1.msra.mxu0 0.0
        %2042 = vmatprep.mubr.f32.mxu0 0.0
        %2043 = vmatmul.mubr.f32.gmra.mrb[0].mxu0 %v1955
        %v2044 = vpop.f32.mrb[0].mxu0
        %v2045 = vadd.f32 %v1916, %v2044
        %v2046 = vpop.f32.mrb[0].mxu0
        %v2047 = vadd.f32 %v1916, %v2046
        %2048 = vmatprep.mubr.f32.mxu0 0.0
        %2049 = vmatmul.mubr.f32.gmra.mrb[0].mxu0 %v1958
        %v2050 = vpop.f32.mrb[0].mxu0
        %v2051 = vadd.f32 %v1921, %v2050
        %v2052 = vpop.f32.mrb[0].mxu0
        %v2053 = vadd.f32 %v1921, %v2052
        %2054 = vmatprep.mubr.f32.mxu0 0.0
        %2055 = vmatmul.mubr.f32.gmra.mrb[0].mxu0 %v1961
        %v2056 = vpop.f32.mrb[0].mxu0
        %v2057 = vadd.f32 %v1926, %v2056
        %v2058 = vpop.f32.mrb[0].mxu0
        %v2059 = vadd.f32 %v1926, %v2058
        %2060 = vmatprep.mubr.f32.mxu0 0.0
        %2061 = vmatmul.mubr.f32.gmra.mrb[0].mxu0 %v1964
        %v2062 = vpop.f32.mrb[0].mxu0
        %v2063 = vadd.f32 %v1931, %v2062
        %v2064 = vpop.f32.mrb[0].mxu0
        %v2065 = vadd.f32 %v1931, %v2064
        %2066 = vmatprep.mubr.f32.mxu0 0.0
        %2067 = vmatmul.mubr.f32.gmra.mrb[0].mxu0 %v1967
        %v2068 = vpop.f32.mrb[0].mxu0
        %v2069 = vadd.f32 %v1936, %v2068
        %v2070 = vpop.f32.mrb[0].mxu0
        %v2071 = vadd.f32 %v1936, %v2070
        %2072 = vmatprep.mubr.f32.mxu0 0.0
        %2073 = vmatmul.mubr.f32.gmra.mrb[0].mxu0 %v1970
        %v2074 = vpop.f32.mrb[0].mxu0
        %v2075 = vadd.f32 %v1941, %v2074
        %v2076 = vpop.f32.mrb[0].mxu0
        %v2077 = vadd.f32 %v1941, %v2076
        %2078 = vmatprep.mubr.f32.mxu0 0.0
        %2079 = vmatmul.mubr.f32.gmra.mrb[0].mxu0 %v1973
        %v2080 = vpop.f32.mrb[0].mxu0
        %v2081 = vadd.f32 %v1946, %v2080
        %v2082 = vpop.f32.mrb[0].mxu0
        %v2083 = vadd.f32 %v1946, %v2082
        %2084 = vmatprep.mubr.f32.mxu0 0.0
        %2085 = vmatmul.mubr.f32.gmra.mrb[0].mxu0 %v1976
        %v2086 = vpop.f32.mrb[0].mxu0
        %v2087 = vadd.f32 %v1951, %v2086
        %v2088 = vpop.f32.mrb[0].mxu0
        %v2089 = vadd.f32 %v1951, %v2088
        %2090 = vdwg.mxu0
        %2091 = vmatprep.subr.mxu0 %v1852
        %2092 = vmatpush1.msra.mxu0 %v1851
        %2093 = vmatprep.subr.mxu0 %v1858
        %2094 = vmatpush1.msra.mxu0 %v1857
        %2095 = vmatprep.subr.mxu0 %v1864
        %2096 = vmatpush1.msra.mxu0 %v1863
        %2097 = vmatprep.subr.mxu0 %v1870
        %2098 = vmatpush1.msra.mxu0 %v1869
        %2099 = vmatprep.subr.mxu0 %v1876
        %2100 = vmatpush1.msra.mxu0 %v1875
        %2101 = vmatprep.subr.mxu0 %v1882
        %2102 = vmatpush1.msra.mxu0 %v1881
        %2103 = vmatprep.subr.mxu0 %v1888
        %2104 = vmatpush1.msra.mxu0 %v1887
        %2105 = vmatprep.subr.mxu0 %v1894
        %2106 = vmatpush1.msra.mxu0 %v1893
        %2107 = vmatprep.subr.mxu0 0.0
        %2108 = vmatpush1.msra.mxu0 0.0
        %2109 = vmatprep.subr.mxu0 0.0
        %2110 = vmatpush1.msra.mxu0 0.0
        %2111 = vmatprep.subr.mxu0 0.0
        %2112 = vmatpush1.msra.mxu0 0.0
        %2113 = vmatprep.subr.mxu0 0.0
        %2114 = vmatpush1.msra.mxu0 0.0
        %2115 = vmatprep.subr.mxu0 0.0
        %2116 = vmatpush1.msra.mxu0 0.0
        %2117 = vmatprep.subr.mxu0 0.0
        %2118 = vmatpush1.msra.mxu0 0.0
        %2119 = vmatprep.subr.mxu0 0.0
        %2120 = vmatpush1.msra.mxu0 0.0
        %2121 = vmatprep.subr.mxu0 0.0
        %2122 = vmatpush1.msra.mxu0 0.0
        %2123 = vmatprep.subr.mxu0 0.0
        %2124 = vmatpush1.msra.mxu0 0.0
        %2125 = vmatprep.subr.mxu0 0.0
        %2126 = vmatpush1.msra.mxu0 0.0
        %2127 = vmatprep.subr.mxu0 0.0
        %2128 = vmatpush1.msra.mxu0 0.0
        %2129 = vmatprep.subr.mxu0 0.0
        %2130 = vmatpush1.msra.mxu0 0.0
        %2131 = vmatprep.subr.mxu0 0.0
        %2132 = vmatpush1.msra.mxu0 0.0
        %2133 = vmatprep.subr.mxu0 0.0
        %2134 = vmatpush1.msra.mxu0 0.0
        %2135 = vmatprep.subr.mxu0 0.0
        %2136 = vmatpush1.msra.mxu0 0.0
        %2137 = vmatprep.subr.mxu0 0.0
        %2138 = vmatpush1.msra.mxu0 0.0
        %2139 = vmatprep.subr.mxu0 0.0
        %2140 = vmatpush1.msra.mxu0 0.0
        %2141 = vmatprep.subr.mxu0 0.0
        %2142 = vmatpush1.msra.mxu0 0.0
        %2143 = vmatprep.subr.mxu0 0.0
        %2144 = vmatpush1.msra.mxu0 0.0
        %2145 = vmatprep.subr.mxu0 0.0
        %2146 = vmatpush1.msra.mxu0 0.0
        %2147 = vmatprep.subr.mxu0 0.0
        %2148 = vmatpush1.msra.mxu0 0.0
        %2149 = vmatprep.subr.mxu0 0.0
        %2150 = vmatpush1.msra.mxu0 0.0
        %2151 = vmatprep.subr.mxu0 0.0
        %2152 = vmatpush1.msra.mxu0 0.0
        %2153 = vmatprep.subr.mxu0 0.0
        %2154 = vmatpush1.msra.mxu0 0.0
        %2155 = vmatprep.mubr.f32.mxu0 0.0
        %2156 = vmatmul.mubr.f32.gmra.mrb[0].mxu0 %v1955
        %v2157 = vpop.f32.mrb[0].mxu0
        %v2158 = vadd.f32 %v1916, %v2157
        %v2159 = vpop.f32.mrb[0].mxu0
        %v2160 = vadd.f32 %v1916, %v2159
        %2161 = vmatprep.mubr.f32.mxu0 0.0
        %2162 = vmatmul.mubr.f32.gmra.mrb[0].mxu0 %v1958
        %v2163 = vpop.f32.mrb[0].mxu0
        %v2164 = vadd.f32 %v1921, %v2163
        %v2165 = vpop.f32.mrb[0].mxu0
        %v2166 = vadd.f32 %v1921, %v2165
        %2167 = vmatprep.mubr.f32.mxu0 0.0
        %2168 = vmatmul.mubr.f32.gmra.mrb[0].mxu0 %v1961
        %v2169 = vpop.f32.mrb[0].mxu0
        %v2170 = vadd.f32 %v1926, %v2169
        %v2171 = vpop.f32.mrb[0].mxu0
        %v2172 = vadd.f32 %v1926, %v2171
        %2173 = vmatprep.mubr.f32.mxu0 0.0
        %2174 = vmatmul.mubr.f32.gmra.mrb[0].mxu0 %v1964
        %v2175 = vpop.f32.mrb[0].mxu0
        %v2176 = vadd.f32 %v1931, %v2175
        %v2177 = vpop.f32.mrb[0].mxu0
        %v2178 = vadd.f32 %v1931, %v2177
        %2179 = vmatprep.mubr.f32.mxu0 0.0
        %2180 = vmatmul.mubr.f32.gmra.mrb[0].mxu0 %v1967
        %v2181 = vpop.f32.mrb[0].mxu0
        %v2182 = vadd.f32 %v1936, %v2181
        %v2183 = vpop.f32.mrb[0].mxu0
        %v2184 = vadd.f32 %v1936, %v2183
        %2185 = vmatprep.mubr.f32.mxu0 0.0
        %2186 = vmatmul.mubr.f32.gmra.mrb[0].mxu0 %v1970
        %v2187 = vpop.f32.mrb[0].mxu0
        %v2188 = vadd.f32 %v1941, %v2187
        %v2189 = vpop.f32.mrb[0].mxu0
        %v2190 = vadd.f32 %v1941, %v2189
        %2191 = vmatprep.mubr.f32.mxu0 0.0
        %2192 = vmatmul.mubr.f32.gmra.mrb[0].mxu0 %v1973
        %v2193 = vpop.f32.mrb[0].mxu0
        %v2194 = vadd.f32 %v1946, %v2193
        %v2195 = vpop.f32.mrb[0].mxu0
        %v2196 = vadd.f32 %v1946, %v2195
        %2197 = vmatprep.mubr.f32.mxu0 0.0
        %2198 = vmatmul.mubr.f32.gmra.mrb[0].mxu0 %v1976
        %v2199 = vpop.f32.mrb[0].mxu0
        %v2200 = vadd.f32 %v1951, %v2199
        %v2201 = vpop.f32.mrb[0].mxu0
        %v2202 = vadd.f32 %v1951, %v2201
        %2203 = vdwg.mxu0
        %2204 = vmatprep.subr.mxu0 %v1854
        %2205 = vmatpush1.msra.mxu0 %v1853
        %2206 = vmatprep.subr.mxu0 %v1860
        %2207 = vmatpush1.msra.mxu0 %v1859
        %2208 = vmatprep.subr.mxu0 %v1866
        %2209 = vmatpush1.msra.mxu0 %v1865
        %2210 = vmatprep.subr.mxu0 %v1872
        %2211 = vmatpush1.msra.mxu0 %v1871
        %2212 = vmatprep.subr.mxu0 %v1878
        %2213 = vmatpush1.msra.mxu0 %v1877
        %2214 = vmatprep.subr.mxu0 %v1884
        %2215 = vmatpush1.msra.mxu0 %v1883
        %2216 = vmatprep.subr.mxu0 %v1890
        %2217 = vmatpush1.msra.mxu0 %v1889
        %2218 = vmatprep.subr.mxu0 %v1896
        %2219 = vmatpush1.msra.mxu0 %v1895
        %2220 = vmatprep.subr.mxu0 0.0
        %2221 = vmatpush1.msra.mxu0 0.0
        %2222 = vmatprep.subr.mxu0 0.0
        %2223 = vmatpush1.msra.mxu0 0.0
        %2224 = vmatprep.subr.mxu0 0.0
        %2225 = vmatpush1.msra.mxu0 0.0
        %2226 = vmatprep.subr.mxu0 0.0
        %2227 = vmatpush1.msra.mxu0 0.0
        %2228 = vmatprep.subr.mxu0 0.0
        %2229 = vmatpush1.msra.mxu0 0.0
        %2230 = vmatprep.subr.mxu0 0.0
        %2231 = vmatpush1.msra.mxu0 0.0
        %2232 = vmatprep.subr.mxu0 0.0
        %2233 = vmatpush1.msra.mxu0 0.0
        %2234 = vmatprep.subr.mxu0 0.0
        %2235 = vmatpush1.msra.mxu0 0.0
        %2236 = vmatprep.subr.mxu0 0.0
        %2237 = vmatpush1.msra.mxu0 0.0
        %2238 = vmatprep.subr.mxu0 0.0
        %2239 = vmatpush1.msra.mxu0 0.0
        %2240 = vmatprep.subr.mxu0 0.0
        %2241 = vmatpush1.msra.mxu0 0.0
        %2242 = vmatprep.subr.mxu0 0.0
        %2243 = vmatpush1.msra.mxu0 0.0
        %2244 = vmatprep.subr.mxu0 0.0
        %2245 = vmatpush1.msra.mxu0 0.0
        %2246 = vmatprep.subr.mxu0 0.0
        %2247 = vmatpush1.msra.mxu0 0.0
        %2248 = vmatprep.subr.mxu0 0.0
        %2249 = vmatpush1.msra.mxu0 0.0
        %2250 = vmatprep.subr.mxu0 0.0
        %2251 = vmatpush1.msra.mxu0 0.0
        %2252 = vmatprep.subr.mxu0 0.0
        %2253 = vmatpush1.msra.mxu0 0.0
        %2254 = vmatprep.subr.mxu0 0.0
        %2255 = vmatpush1.msra.mxu0 0.0
        %2256 = vmatprep.subr.mxu0 0.0
        %2257 = vmatpush1.msra.mxu0 0.0
        %2258 = vmatprep.subr.mxu0 0.0
        %2259 = vmatpush1.msra.mxu0 0.0
        %2260 = vmatprep.subr.mxu0 0.0
        %2261 = vmatpush1.msra.mxu0 0.0
        %2262 = vmatprep.subr.mxu0 0.0
        %2263 = vmatpush1.msra.mxu0 0.0
        %2264 = vmatprep.subr.mxu0 0.0
        %2265 = vmatpush1.msra.mxu0 0.0
        %2266 = vmatprep.subr.mxu0 0.0
        %2267 = vmatpush1.msra.mxu0 0.0
        %2268 = vmatprep.mubr.f32.mxu0 0.0
        %2269 = vmatmul.mubr.f32.gmra.mrb[0].mxu0 %v1955
        %v2270 = vpop.f32.mrb[0].mxu0
        %v2271 = vadd.f32 %v1916, %v2270
        %v2272 = vpop.f32.mrb[0].mxu0
        %v2273 = vadd.f32 %v1916, %v2272
        %2274 = vmatprep.mubr.f32.mxu0 0.0
        %2275 = vmatmul.mubr.f32.gmra.mrb[0].mxu0 %v1958
        %v2276 = vpop.f32.mrb[0].mxu0
        %v2277 = vadd.f32 %v1921, %v2276
        %v2278 = vpop.f32.mrb[0].mxu0
        %v2279 = vadd.f32 %v1921, %v2278
        %2280 = vmatprep.mubr.f32.mxu0 0.0
        %2281 = vmatmul.mubr.f32.gmra.mrb[0].mxu0 %v1961
        %v2282 = vpop.f32.mrb[0].mxu0
        %v2283 = vadd.f32 %v1926, %v2282
        %v2284 = vpop.f32.mrb[0].mxu0
        %v2285 = vadd.f32 %v1926, %v2284
        %2286 = vmatprep.mubr.f32.mxu0 0.0
        %2287 = vmatmul.mubr.f32.gmra.mrb[0].mxu0 %v1964
        %v2288 = vpop.f32.mrb[0].mxu0
        %v2289 = vadd.f32 %v1931, %v2288
        %v2290 = vpop.f32.mrb[0].mxu0
        %v2291 = vadd.f32 %v1931, %v2290
        %2292 = vmatprep.mubr.f32.mxu0 0.0
        %2293 = vmatmul.mubr.f32.gmra.mrb[0].mxu0 %v1967
        %v2294 = vpop.f32.mrb[0].mxu0
        %v2295 = vadd.f32 %v1936, %v2294
        %v2296 = vpop.f32.mrb[0].mxu0
        %v2297 = vadd.f32 %v1936, %v2296
        %2298 = vmatprep.mubr.f32.mxu0 0.0
        %2299 = vmatmul.mubr.f32.gmra.mrb[0].mxu0 %v1970
        %v2300 = vpop.f32.mrb[0].mxu0
        %v2301 = vadd.f32 %v1941, %v2300
        %v2302 = vpop.f32.mrb[0].mxu0
        %v2303 = vadd.f32 %v1941, %v2302
        %2304 = vmatprep.mubr.f32.mxu0 0.0
        %2305 = vmatmul.mubr.f32.gmra.mrb[0].mxu0 %v1973
        %v2306 = vpop.f32.mrb[0].mxu0
        %v2307 = vadd.f32 %v1946, %v2306
        %v2308 = vpop.f32.mrb[0].mxu0
        %v2309 = vadd.f32 %v1946, %v2308
        %2310 = vmatprep.mubr.f32.mxu0 0.0
        %2311 = vmatmul.mubr.f32.gmra.mrb[0].mxu0 %v1976
        %v2312 = vpop.f32.mrb[0].mxu0
        %v2313 = vadd.f32 %v1951, %v2312
        %v2314 = vpop.f32.mrb[0].mxu0
        %v2315 = vadd.f32 %v1951, %v2314
        %2316 = vdwg.mxu0
        %v2317 = vmax.f32 %v2045, 0.0
        %v2318 = vmax.f32 %v2047, 0.0
        %v2319 = vmax.f32 %v2158, 0.0
        %v2320 = vmax.f32 %v2160, 0.0
        %v2321 = vmax.f32 %v2271, 0.0
        %v2322 = vmax.f32 %v2273, 0.0
        %v2323 = vmax.f32 %v2051, 0.0
        %v2324 = vmax.f32 %v2053, 0.0
        %v2325 = vmax.f32 %v2164, 0.0
        %v2326 = vmax.f32 %v2166, 0.0
        %v2327 = vmax.f32 %v2277, 0.0
        %v2328 = vmax.f32 %v2279, 0.0
        %v2329 = vmax.f32 %v2057, 0.0
        %v2330 = vmax.f32 %v2059, 0.0
        %v2331 = vmax.f32 %v2170, 0.0
        %v2332 = vmax.f32 %v2172, 0.0
        %v2333 = vmax.f32 %v2283, 0.0
        %v2334 = vmax.f32 %v2285, 0.0
        %v2335 = vmax.f32 %v2063, 0.0
        %v2336 = vmax.f32 %v2065, 0.0
        %v2337 = vmax.f32 %v2176, 0.0
        %v2338 = vmax.f32 %v2178, 0.0
        %v2339 = vmax.f32 %v2289, 0.0
        %v2340 = vmax.f32 %v2291, 0.0
        %v2341 = vmax.f32 %v2069, 0.0
        %v2342 = vmax.f32 %v2071, 0.0
        %v2343 = vmax.f32 %v2182, 0.0
        %v2344 = vmax.f32 %v2184, 0.0
        %v2345 = vmax.f32 %v2295, 0.0
        %v2346 = vmax.f32 %v2297, 0.0
        %v2347 = vmax.f32 %v2075, 0.0
        %v2348 = vmax.f32 %v2077, 0.0
        %v2349 = vmax.f32 %v2188, 0.0
        %v2350 = vmax.f32 %v2190, 0.0
        %v2351 = vmax.f32 %v2301, 0.0
        %v2352 = vmax.f32 %v2303, 0.0
        %v2353 = vmax.f32 %v2081, 0.0
        %v2354 = vmax.f32 %v2083, 0.0
        %v2355 = vmax.f32 %v2194, 0.0
        %v2356 = vmax.f32 %v2196, 0.0
        %v2357 = vmax.f32 %v2307, 0.0
        %v2358 = vmax.f32 %v2309, 0.0
        %v2359 = vmax.f32 %v2087, 0.0
        %v2360 = vmax.f32 %v2089, 0.0
        %v2361 = vmax.f32 %v2200, 0.0
        %v2362 = vmax.f32 %v2202, 0.0
        %v2363 = vmax.f32 %v2313, 0.0
        %v2364 = vmax.f32 %v2315, 0.0
        %v2365 = vld [vmem:[%s8] sm:$0xff]
        %v2367 = vsel %vm1953, %v2365, 0
        %2369 = vmatprep.subr.mxu0 %v2318
        %2370 = vmatpush1.msra.mxu0 %v2317
        %2371 = vmatprep.subr.mxu0 %v2324
        %2372 = vmatpush1.msra.mxu0 %v2323
        %2373 = vmatprep.subr.mxu0 %v2330
        %2374 = vmatpush1.msra.mxu0 %v2329
        %2375 = vmatprep.subr.mxu0 %v2336
        %2376 = vmatpush1.msra.mxu0 %v2335
        %2377 = vmatprep.subr.mxu0 %v2342
        %2378 = vmatpush1.msra.mxu0 %v2341
        %2379 = vmatprep.subr.mxu0 %v2348
        %2380 = vmatpush1.msra.mxu0 %v2347
        %2381 = vmatprep.subr.mxu0 %v2354
        %2382 = vmatpush1.msra.mxu0 %v2353
        %2383 = vmatprep.subr.mxu0 %v2360
        %2384 = vmatpush1.msra.mxu0 %v2359
        %2385 = vmatprep.subr.mxu0 0.0
        %2386 = vmatpush1.msra.mxu0 0.0
        %2387 = vmatprep.subr.mxu0 0.0
        %2388 = vmatpush1.msra.mxu0 0.0
        %2389 = vmatprep.subr.mxu0 0.0
        %2390 = vmatpush1.msra.mxu0 0.0
        %2391 = vmatprep.subr.mxu0 0.0
        %2392 = vmatpush1.msra.mxu0 0.0
        %2393 = vmatprep.subr.mxu0 0.0
        %2394 = vmatpush1.msra.mxu0 0.0
        %2395 = vmatprep.subr.mxu0 0.0
        %2396 = vmatpush1.msra.mxu0 0.0
        %2397 = vmatprep.subr.mxu0 0.0
        %2398 = vmatpush1.msra.mxu0 0.0
        %2399 = vmatprep.subr.mxu0 0.0
        %2400 = vmatpush1.msra.mxu0 0.0
        %2401 = vmatprep.subr.mxu0 0.0
        %2402 = vmatpush1.msra.mxu0 0.0
        %2403 = vmatprep.subr.mxu0 0.0
        %2404 = vmatpush1.msra.mxu0 0.0
        %2405 = vmatprep.subr.mxu0 0.0
        %2406 = vmatpush1.msra.mxu0 0.0
        %2407 = vmatprep.subr.mxu0 0.0
        %2408 = vmatpush1.msra.mxu0 0.0
        %2409 = vmatprep.subr.mxu0 0.0
        %2410 = vmatpush1.msra.mxu0 0.0
        %2411 = vmatprep.subr.mxu0 0.0
        %2412 = vmatpush1.msra.mxu0 0.0
        %2413 = vmatprep.subr.mxu0 0.0
        %2414 = vmatpush1.msra.mxu0 0.0
        %2415 = vmatprep.subr.mxu0 0.0
        %2416 = vmatpush1.msra.mxu0 0.0
        %2417 = vmatprep.subr.mxu0 0.0
        %2418 = vmatpush1.msra.mxu0 0.0
        %2419 = vmatprep.subr.mxu0 0.0
        %2420 = vmatpush1.msra.mxu0 0.0
        %2421 = vmatprep.subr.mxu0 0.0
        %2422 = vmatpush1.msra.mxu0 0.0
        %2423 = vmatprep.subr.mxu0 0.0
        %2424 = vmatpush1.msra.mxu0 0.0
        %2425 = vmatprep.subr.mxu0 0.0
        %2426 = vmatpush1.msra.mxu0 0.0
        %2427 = vmatprep.subr.mxu0 0.0
        %2428 = vmatpush1.msra.mxu0 0.0
        %2429 = vmatprep.subr.mxu0 0.0
        %2430 = vmatpush1.msra.mxu0 0.0
        %2431 = vmatprep.subr.mxu0 0.0
        %2432 = vmatpush1.msra.mxu0 0.0
        %2433 = vmatprep.mubr.f32.mxu0 0.0
        %2434 = vmatmul.mubr.f32.gmra.mrb[0].mxu0 %v2367
        %v2435 = vpop.f32.mrb[0].mxu0
        %v2436 = vadd.f32 0.0, %v2435
        %v2437 = vpop.f32.mrb[0].mxu0
        %v2438 = vadd.f32 0.0, %v2437
        %2439 = vdwg.mxu0
        %2440 = vmatprep.subr.mxu0 %v2320
        %2441 = vmatpush1.msra.mxu0 %v2319
        %2442 = vmatprep.subr.mxu0 %v2326
        %2443 = vmatpush1.msra.mxu0 %v2325
        %2444 = vmatprep.subr.mxu0 %v2332
        %2445 = vmatpush1.msra.mxu0 %v2331
        %2446 = vmatprep.subr.mxu0 %v2338
        %2447 = vmatpush1.msra.mxu0 %v2337
        %2448 = vmatprep.subr.mxu0 %v2344
        %2449 = vmatpush1.msra.mxu0 %v2343
        %2450 = vmatprep.subr.mxu0 %v2350
        %2451 = vmatpush1.msra.mxu0 %v2349
        %2452 = vmatprep.subr.mxu0 %v2356
        %2453 = vmatpush1.msra.mxu0 %v2355
        %2454 = vmatprep.subr.mxu0 %v2362
        %2455 = vmatpush1.msra.mxu0 %v2361
        %2456 = vmatprep.subr.mxu0 0.0
        %2457 = vmatpush1.msra.mxu0 0.0
        %2458 = vmatprep.subr.mxu0 0.0
        %2459 = vmatpush1.msra.mxu0 0.0
        %2460 = vmatprep.subr.mxu0 0.0
        %2461 = vmatpush1.msra.mxu0 0.0
        %2462 = vmatprep.subr.mxu0 0.0
        %2463 = vmatpush1.msra.mxu0 0.0
        %2464 = vmatprep.subr.mxu0 0.0
        %2465 = vmatpush1.msra.mxu0 0.0
        %2466 = vmatprep.subr.mxu0 0.0
        %2467 = vmatpush1.msra.mxu0 0.0
        %2468 = vmatprep.subr.mxu0 0.0
        %2469 = vmatpush1.msra.mxu0 0.0
        %2470 = vmatprep.subr.mxu0 0.0
        %2471 = vmatpush1.msra.mxu0 0.0
        %2472 = vmatprep.subr.mxu0 0.0
        %2473 = vmatpush1.msra.mxu0 0.0
        %2474 = vmatprep.subr.mxu0 0.0
        %2475 = vmatpush1.msra.mxu0 0.0
        %2476 = vmatprep.subr.mxu0 0.0
        %2477 = vmatpush1.msra.mxu0 0.0
        %2478 = vmatprep.subr.mxu0 0.0
        %2479 = vmatpush1.msra.mxu0 0.0
        %2480 = vmatprep.subr.mxu0 0.0
        %2481 = vmatpush1.msra.mxu0 0.0
        %2482 = vmatprep.subr.mxu0 0.0
        %2483 = vmatpush1.msra.mxu0 0.0
        %2484 = vmatprep.subr.mxu0 0.0
        %2485 = vmatpush1.msra.mxu0 0.0
        %2486 = vmatprep.subr.mxu0 0.0
        %2487 = vmatpush1.msra.mxu0 0.0
        %2488 = vmatprep.subr.mxu0 0.0
        %2489 = vmatpush1.msra.mxu0 0.0
        %2490 = vmatprep.subr.mxu0 0.0
        %2491 = vmatpush1.msra.mxu0 0.0
        %2492 = vmatprep.subr.mxu0 0.0
        %2493 = vmatpush1.msra.mxu0 0.0
        %2494 = vmatprep.subr.mxu0 0.0
        %2495 = vmatpush1.msra.mxu0 0.0
        %2496 = vmatprep.subr.mxu0 0.0
        %2497 = vmatpush1.msra.mxu0 0.0
        %2498 = vmatprep.subr.mxu0 0.0
        %2499 = vmatpush1.msra.mxu0 0.0
        %2500 = vmatprep.subr.mxu0 0.0
        %2501 = vmatpush1.msra.mxu0 0.0
        %2502 = vmatprep.subr.mxu0 0.0
        %2503 = vmatpush1.msra.mxu0 0.0
        %2504 = vmatprep.mubr.f32.mxu0 0.0
        %2505 = vmatmul.mubr.f32.gmra.mrb[0].mxu0 %v2367
        %v2506 = vpop.f32.mrb[0].mxu0
        %v2507 = vadd.f32 0.0, %v2506
        %v2508 = vpop.f32.mrb[0].mxu0
        %v2509 = vadd.f32 0.0, %v2508
        %2510 = vdwg.mxu0
        %2511 = vmatprep.subr.mxu0 %v2322
        %2512 = vmatpush1.msra.mxu0 %v2321
        %2513 = vmatprep.subr.mxu0 %v2328
        %2514 = vmatpush1.msra.mxu0 %v2327
        %2515 = vmatprep.subr.mxu0 %v2334
        %2516 = vmatpush1.msra.mxu0 %v2333
        %2517 = vmatprep.subr.mxu0 %v2340
        %2518 = vmatpush1.msra.mxu0 %v2339
        %2519 = vmatprep.subr.mxu0 %v2346
        %2520 = vmatpush1.msra.mxu0 %v2345
        %2521 = vmatprep.subr.mxu0 %v2352
        %2522 = vmatpush1.msra.mxu0 %v2351
        %2523 = vmatprep.subr.mxu0 %v2358
        %2524 = vmatpush1.msra.mxu0 %v2357
        %2525 = vmatprep.subr.mxu0 %v2364
        %2526 = vmatpush1.msra.mxu0 %v2363
        %2527 = vmatprep.subr.mxu0 0.0
        %2528 = vmatpush1.msra.mxu0 0.0
        %2529 = vmatprep.subr.mxu0 0.0
        %2530 = vmatpush1.msra.mxu0 0.0
        %2531 = vmatprep.subr.mxu0 0.0
        %2532 = vmatpush1.msra.mxu0 0.0
        %2533 = vmatprep.subr.mxu0 0.0
        %2534 = vmatpush1.msra.mxu0 0.0
        %2535 = vmatprep.subr.mxu0 0.0
        %2536 = vmatpush1.msra.mxu0 0.0
        %2537 = vmatprep.subr.mxu0 0.0
        %2538 = vmatpush1.msra.mxu0 0.0
        %2539 = vmatprep.subr.mxu0 0.0
        %2540 = vmatpush1.msra.mxu0 0.0
        %2541 = vmatprep.subr.mxu0 0.0
        %2542 = vmatpush1.msra.mxu0 0.0
        %2543 = vmatprep.subr.mxu0 0.0
        %2544 = vmatpush1.msra.mxu0 0.0
        %2545 = vmatprep.subr.mxu0 0.0
        %2546 = vmatpush1.msra.mxu0 0.0
        %2547 = vmatprep.subr.mxu0 0.0
        %2548 = vmatpush1.msra.mxu0 0.0
        %2549 = vmatprep.subr.mxu0 0.0
        %2550 = vmatpush1.msra.mxu0 0.0
        %2551 = vmatprep.subr.mxu0 0.0
        %2552 = vmatpush1.msra.mxu0 0.0
        %2553 = vmatprep.subr.mxu0 0.0
        %2554 = vmatpush1.msra.mxu0 0.0
        %2555 = vmatprep.subr.mxu0 0.0
        %2556 = vmatpush1.msra.mxu0 0.0
        %2557 = vmatprep.subr.mxu0 0.0
        %2558 = vmatpush1.msra.mxu0 0.0
        %2559 = vmatprep.subr.mxu0 0.0
        %2560 = vmatpush1.msra.mxu0 0.0
        %2561 = vmatprep.subr.mxu0 0.0
        %2562 = vmatpush1.msra.mxu0 0.0
        %2563 = vmatprep.subr.mxu0 0.0
        %2564 = vmatpush1.msra.mxu0 0.0
        %2565 = vmatprep.subr.mxu0 0.0
        %2566 = vmatpush1.msra.mxu0 0.0
        %2567 = vmatprep.subr.mxu0 0.0
        %2568 = vmatpush1.msra.mxu0 0.0
        %2569 = vmatprep.subr.mxu0 0.0
        %2570 = vmatpush1.msra.mxu0 0.0
        %2571 = vmatprep.subr.mxu0 0.0
        %2572 = vmatpush1.msra.mxu0 0.0
        %2573 = vmatprep.subr.mxu0 0.0
        %2574 = vmatpush1.msra.mxu0 0.0
        %2575 = vmatprep.mubr.f32.mxu0 0.0
        %2576 = vmatmul.mubr.f32.gmra.mrb[0].mxu0 %v2367
        %v2577 = vpop.f32.mrb[0].mxu0
        %v2578 = vadd.f32 0.0, %v2577
        %v2579 = vpop.f32.mrb[0].mxu0
        %v2580 = vadd.f32 0.0, %v2579
        %2581 = vdwg.mxu0
        %s2582 = sld [smem:[#allocation2]]
        %v2583 = vstv %s2582
        %v2584 = vadd.f32 %v2436, %v2583
        %v2585 = vadd.f32 %v2438, %v2583
        %v2586 = vadd.f32 %v2507, %v2583
        %v2587 = vadd.f32 %v2509, %v2583
        %v2588 = vadd.f32 %v2578, %v2583
        %v2589 = vadd.f32 %v2580, %v2583
        %v2596 = vcombine.low %v2584, %v2585
        %v2597 = vcombine.low %v2586, %v2587
        %v2598 = vcombine.low %v2588, %v2589
        %v2600 = vunpack.c.l.s4 1966171168
        %v2601 = vunpack.c.0.s8 %v2600
        %v2602 = vlaneseq
        %v2603 = vshrl.u32 %v2602, 7
        %v2604 = vsub.s32 %v2601, %v2603
        %v2605 = vrot.slane %v2596, %v2604
        %v2607 = vunpack.c.l.s4 1966171168
        %v2608 = vunpack.c.0.s8 %v2607
        %v2609 = vlaneseq
        %v2610 = vshrl.u32 %v2609, 7
        %v2611 = vsub.s32 %v2608, %v2610
        %v2612 = vrot.slane %v2597, %v2611
        %v2614 = vunpack.c.l.s4 1966171168
        %v2615 = vunpack.c.0.s8 %v2614
        %v2616 = vlaneseq
        %v2617 = vshrl.u32 %v2616, 7
        %v2618 = vsub.s32 %v2615, %v2617
        %v2619 = vrot.slane %v2598, %v2618
        %v2620 = vcombine.low %v2605, %v2612
        %v2622 = vunpack.c.l.s4 1966171168
        %v2623 = vunpack.c.0.s8 %v2622
        %v2624 = vlaneseq
        %v2625 = vshrl.u32 %v2624, 7
        %v2626 = vsub.s32 %v2623, %v2625
        %v2627 = vrot.slane %v2620, %v2626
        %v2629 = vunpack.c.l.s4 1966171168
        %v2630 = vunpack.c.0.s8 %v2629
        %v2631 = vlaneseq
        %v2632 = vshrl.u32 %v2631, 7
        %v2633 = vsub.s32 %v2630, %v2632
        %v2634 = vrot.slane %v2619, %v2633
        %v2635 = vcombine.low %v2627, %v2634
        %v2637 = vlaneseq
        %vm2638 = vcmp.ge.s32.totalorder %v2637, 0
        %vm2639 = vcmp.lt.s32.totalorder %v2637, 768
        %vm2640 = vmand %vm2638, %vm2639
        %2641 = vst.msk [vmem:[%s569] sm:$0x3f] %vm2640, %v2635
        %s2642 = smul.u32 6, %s22
        %p2643 = scmp.lt.s32.totalorder %s2642, 11
        %s2644 = scalar_select %p2643, %s2642, 11
        %s2645 = scalar_lea.vmem %s10, %s2644
        // Predicated region
        $region84: #{reward_decoder_forward.1} parent=78 // pred_check
          %p2646 = pneg %p255
        $region85: #{reward_decoder_forward.1} parent=78 // pred_check_branch
          %2648 = sbr.rel (%p2646) target = $region87
        $region86: #{reward_decoder_forward.1} parent=78 // pred_region
          %s2649 = smul.u32 6, %s22
        $region87: #{reward_decoder_forward.1} parent=78 // pred_fallthru
          _
      $region79: #{reward_decoder_forward.1} parent=5 // pred_fallthru
        _
      %p2650 = scmp.le.s32.totalorder 2, %s17
      // Predicated region
      $region88: #{reward_decoder_forward.1} parent=5 // pred_check
        %p2651 = pneg %p2650
      $region89: #{reward_decoder_forward.1} parent=5 // pred_check_branch
        %2653 = sbr.rel (%p2651) target = $region91
      $region90: #{reward_decoder_forward.1} parent=5 // pred_region
        %s2654 = ssub.s32 %s17, 2
        // Predicated region
        $region92: #{reward_decoder_forward.1} parent=90 // pred_check
          %p2655 = pneg %p261
        $region93: #{reward_decoder_forward.1} parent=90 // pred_check_branch
          %2657 = sbr.rel (%p2655) target = $region95
        $region94: #{reward_decoder_forward.1} parent=90 // pred_region
          %s2658 = smul.u32 6, %s23
          %p2659 = scmp.lt.s32.totalorder %s2658, 11
          %s2660 = scalar_select %p2659, %s2658, 11
          %s2661 = scalar_lea.vmem %s10, %s2660
        $region95: #{reward_decoder_forward.1} parent=90 // pred_fallthru
          _
      $region91: #{reward_decoder_forward.1} parent=5 // pred_fallthru
        _
    $region6: #{reward_decoder_forward.1} parent=1 // loop_footer
      %s21 = sadd.s32 1, %s17
    $region7: #{reward_decoder_forward.1} parent=1 // loop_footer_branch
      %16 = sbr.rel target = $region3
    $region8: #{reward_decoder_forward.1} parent=1 // loop_exit
      _

</llo_original>
